<compile_context>
chip_gen: v7x
topology: tpu7x:2x2x1
jax: 0.10.0
libtpu: 0.0.40
codegen_flags: <defaults>
</compile_context>

<pallas_src>
import functools
import math

import jax
import jax.numpy as jnp
from jax.experimental import pallas as pl
from jax.experimental.pallas import tpu as pltpu

_NEG_INF = -1e30                     # finite mask sentinel (no -inf -> NaN)
_GELU_C = math.sqrt(2.0 / math.pi)


def _gelu_tanh(x):
    # TODO(synk): nn.GELU() uses exact erf; tanh-approx GELU (EUP-friendly)
    # differs by <~3e-3 absolute.
    return 0.5 * x * (1.0 + jnp.tanh(_GELU_C * (x + 0.044715 * x * x * x)))


def _full_spec(shape):
    nd = len(shape)
    return pl.BlockSpec(shape, lambda *_: (0,) * nd)


# ---------------------------------------------------------------------------
# Kernel 1: fused QKV projection + local-masked MHA + dense output projection
# + residual.  grid = (batch,), "parallel".  Emits per-batch f32 partial sums
# (sum, sum of squares) of s1 = x + attn(x) for BatchNorm1.
# ---------------------------------------------------------------------------
def _attn_kernel(x_ref, wqkv_ref, bqkv_ref, wo_ref, bo_ref,
                 s1_ref, psum_ref, psq_ref, *, n_heads, d_k, d_v, half_ws):
    L = x_ref.shape[0]
    H = n_heads
    hdk = H * d_k

    x = x_ref[...].astype(jnp.float32)                          # [L, D]

    # fused Q/K/V projection; softmax scale already folded into the Q columns.
    qkv = jnp.dot(x_ref[...], wqkv_ref[...],
                  preferred_element_type=jnp.float32) + bqkv_ref[...]

    # head-major [H, L, d] stacks (concat on a new leading axis only).
    def heads(off, d):
        return jnp.stack(
            [qkv[:, off + h * d: off + (h + 1) * d] for h in range(H)],
            axis=0).astype(jnp.bfloat16)                        # [H, L, d]

    q = heads(0, d_k)
    k = heads(hdk, d_k)
    v = heads(2 * hdk, d_v)

    # batched (over heads) scores, all f32.
    s = jnp.einsum('hqd,hkd->hqk', q, k,
                   preferred_element_type=jnp.float32)          # [H, L, L]

    # in-kernel local band mask: |i - j| <= local_ws//2 is masked OUT,
    # exactly like get_local_mask (finite sentinel instead of -inf).
    qi = jax.lax.broadcasted_iota(jnp.int32, (L, L), 0)
    ki = jax.lax.broadcasted_iota(jnp.int32, (L, L), 1)
    bias = jnp.where(jnp.abs(qi - ki) <= half_ws,
                     jnp.float32(_NEG_INF), jnp.float32(0.0))   # [L, L]
    s = s + bias                                                # broadcast

    m = jnp.max(s, axis=-1, keepdims=True)
    e = jnp.exp(s - m)
    p = e * pl.reciprocal(jnp.sum(e, axis=-1, keepdims=True), approx=True)

    ctx = jnp.einsum('hqk,hkd->hqd', p.astype(jnp.bfloat16), v,
                     preferred_element_type=jnp.float32)        # [H, L, d_v]

    # merge heads back to [L, H*d_v] (lane-axis concat) + ONE dense D-wide
    # output projection against the original W_O.
    ctx2 = jnp.concatenate([ctx[h] for h in range(H)],
                           axis=-1).astype(jnp.bfloat16)        # [L, H*d_v]
    attn = jnp.dot(ctx2, wo_ref[...],
                   preferred_element_type=jnp.float32) + bo_ref[...]

    s1 = x + attn                                               # residual, f32
    s1_ref[...] = s1.astype(s1_ref.dtype)                       # bf16 to HBM
    psum_ref[...] = jnp.sum(s1, axis=0, keepdims=True)          # f32 partials
    psq_ref[...] = jnp.sum(s1 * s1, axis=0, keepdims=True)


# ---------------------------------------------------------------------------
# Kernel 2: BN1 (precomputed scale/shift) + FFN (Linear-GELU-Linear) +
# residual.  grid = (row tiles,), "parallel".  Emits per-tile f32 partial
# sums for BatchNorm2 (padded rows masked out).
# ---------------------------------------------------------------------------
def _ffn_kernel(s1_ref, sc1_ref, sh1_ref, w1_ref, b1_ref, w2_ref, b2_ref,
                s2_ref, psum_ref, psq_ref, *, n_valid, padded):
    s1n = s1_ref[...].astype(jnp.float32) * sc1_ref[...] + sh1_ref[...]

    h = jnp.dot(s1n.astype(jnp.bfloat16), w1_ref[...],
                preferred_element_type=jnp.float32) + b1_ref[...]
    h = _gelu_tanh(h)
    ff = jnp.dot(h.astype(jnp.bfloat16), w2_ref[...],
                 preferred_element_type=jnp.float32) + b2_ref[...]

    s2 = s1n + ff                                               # residual, f32
    s2_ref[...] = s2.astype(s2_ref.dtype)                       # bf16 to HBM

    if padded:                                                  # static branch
        tr = s2.shape[0]
        rid = pl.program_id(0) * tr + jax.lax.broadcasted_iota(
            jnp.int32, (tr, 1), 0)
        valid = (rid < n_valid).astype(jnp.float32)             # [tr, 1]
        sm = s2 * valid
        psum_ref[...] = jnp.sum(sm, axis=0, keepdims=True)
        psq_ref[...] = jnp.sum(sm * sm, axis=0, keepdims=True)
    else:
        psum_ref[...] = jnp.sum(s2, axis=0, keepdims=True)
        psq_ref[...] = jnp.sum(s2 * s2, axis=0, keepdims=True)


# ---------------------------------------------------------------------------
# Kernel 3: BN2 epilogue — pure fused scale-and-shift (bf16 in, out dtype out).
# grid = (row tiles,), "parallel".
# ---------------------------------------------------------------------------
def _bn_kernel(s2_ref, sc_ref, sh_ref, out_ref):
    out_ref[...] = (s2_ref[...].astype(jnp.float32) * sc_ref[...]
                    + sh_ref[...]).astype(out_ref.dtype)


def tst_encoder_layer(src, params, *, n_heads, local_ws, eps=1e-5,
                      tile_rows=256, vmem_limit_mb=48):
    # tile_rows: 256 is a good default on v6e/v5e; keep <=256 on v7x.
    # vmem_limit_mb: 48 MiB is safe across v5e/v6e/v7x (64 MiB physical).
    B, L, D = src.shape
    H = n_heads
    d_k = D // H
    d_v = D // H
    d_ff = params["w1"].shape[0]
    scale = float(d_k) ** -0.5                  # lsa=False -> fixed scale
    f32, bf16 = jnp.float32, jnp.bfloat16
    out_dtype = src.dtype
    n_rows = B * L
    inv_n = 1.0 / float(n_rows)

    # ---- host-side weight prep: [in, out] layout, fused QKV, folded scale ----
    wq_t = params["wq"].T.astype(f32) * scale
    wqkv = jnp.concatenate(
        [wq_t, params["wk"].T.astype(f32), params["wv"].T.astype(f32)],
        axis=1).astype(bf16)                                     # [D, 2Hdk+Hdv]
    bqkv = jnp.concatenate(
        [params["bq"].astype(f32) * scale, params["bk"].astype(f32),
         params["bv"].astype(f32)], axis=1)                      # [1, ...]
    wo = params["wo"].T.astype(bf16)                             # [H*dv, D]
    bo = params["bo"].astype(f32)
    w1_t = params["w1"].T.astype(bf16)                           # [D, d_ff]
    b1 = params["b1"].astype(f32)
    w2_t = params["w2"].T.astype(bf16)                           # [d_ff, D]
    b2 = params["b2"].astype(f32)

    qkv_w = wqkv.shape[1]
    hdv = H * d_v

    cparams = pltpu.CompilerParams(
        dimension_semantics=("parallel",),
        vmem_limit_bytes=int(vmem_limit_mb) * 1024 * 1024)

    src_bf = src.astype(bf16)

    # ---- kernel 1: MHA + residual, grid over batch ----
    s1_3d, psum1, psq1 = pl.pallas_call(
        functools.partial(_attn_kernel, n_heads=H, d_k=d_k, d_v=d_v,
                          half_ws=local_ws // 2),
        grid=(B,),
        in_specs=[
            pl.BlockSpec((None, L, D), lambda b: (b, 0, 0)),     # src (bf16)
            _full_spec((D, qkv_w)),                              # fused Wqkv
            _full_spec((1, qkv_w)),                              # fused bias
            _full_spec((hdv, D)),                                # Wo
            _full_spec((1, D)),                                  # bo
        ],
        out_specs=[
            pl.BlockSpec((None, L, D), lambda b: (b, 0, 0)),     # s1 = x+attn
            pl.BlockSpec((None, 1, D), lambda b: (b, 0, 0)),     # BN1 sum
            pl.BlockSpec((None, 1, D), lambda b: (b, 0, 0)),     # BN1 sum sq
        ],
        out_shape=[
            jax.ShapeDtypeStruct((B, L, D), bf16),
            jax.ShapeDtypeStruct((B, 1, D), f32),
            jax.ShapeDtypeStruct((B, 1, D), f32),
        ],
        compiler_params=cparams,
    )(src_bf, wqkv, bqkv, wo, bo)

    # ---- BatchNorm scale/shift from f32 partials (tiny [1, D] XLA ops) ----
    def bn_affine(psum, psq, gamma, beta):
        mean = jnp.sum(psum, axis=0) * inv_n                     # [1, D]
        var = jnp.maximum(jnp.sum(psq, axis=0) * inv_n - mean * mean, 0.0)
        sc = gamma.astype(f32) * jax.lax.rsqrt(var + eps)
        sh = beta.astype(f32) - mean * sc
        return sc, sh

    sc1, sh1 = bn_affine(psum1, psq1, params["g1"], params["be1"])

    s1 = s1_3d.reshape(n_rows, D)              # free wrapper-side reshape

    # ---- row-tile selection: sublane-aligned tile_rows, pad + mask tail ----
    tr = max(8, (min(int(tile_rows), n_rows) // 8) * 8)
    n_rows_pad = -(-n_rows // tr) * tr
    n_tiles = n_rows_pad // tr
    padded = n_rows_pad != n_rows
    if padded:
        s1 = jnp.pad(s1, ((0, n_rows_pad - n_rows), (0, 0)))

    # ---- kernel 2: BN1 + FFN + residual, grid over row tiles ----
    s2, psum2, psq2 = pl.pallas_call(
        functools.partial(_ffn_kernel, n_valid=n_rows, padded=padded),
        grid=(n_tiles,),
        in_specs=[
            pl.BlockSpec((tr, D), lambda i: (i, 0)),             # s1 tile
            _full_spec((1, D)), _full_spec((1, D)),              # BN1 scale/shift
            _full_spec((D, d_ff)), _full_spec((1, d_ff)),        # W1, b1
            _full_spec((d_ff, D)), _full_spec((1, D)),           # W2, b2
        ],
        out_specs=[
            pl.BlockSpec((tr, D), lambda i: (i, 0)),             # s2 tile
            pl.BlockSpec((None, 1, D), lambda i: (i, 0, 0)),     # BN2 sum
            pl.BlockSpec((None, 1, D), lambda i: (i, 0, 0)),     # BN2 sum sq
        ],
        out_shape=[
            jax.ShapeDtypeStruct((n_rows_pad, D), bf16),
            jax.ShapeDtypeStruct((n_tiles, 1, D), f32),
            jax.ShapeDtypeStruct((n_tiles, 1, D), f32),
        ],
        compiler_params=cparams,
    )(s1, sc1, sh1, w1_t, b1, w2_t, b2)

    sc2, sh2 = bn_affine(psum2, psq2, params["g2"], params["be2"])

    # ---- kernel 3: BN2 scale-and-shift epilogue ----
    out2d = pl.pallas_call(
        _bn_kernel,
        grid=(n_tiles,),
        in_specs=[
            pl.BlockSpec((tr, D), lambda i: (i, 0)),
            _full_spec((1, D)), _full_spec((1, D)),
        ],
        out_specs=pl.BlockSpec((tr, D), lambda i: (i, 0)),
        out_shape=jax.ShapeDtypeStruct((n_rows_pad, D), out_dtype),
        compiler_params=cparams,
    )(s2, sc2, sh2)

    if padded:
        out2d = out2d[:n_rows]
    return out2d.reshape(B, L, D)


# ---------------------------------------------------------------------------
# Parameters (PyTorch nn.Linear convention: weight [out, in], bias [1, out]).
# ---------------------------------------------------------------------------
def init_params(key, d_model, n_heads, d_ff):
    d_k = d_model // n_heads
    d_v = d_model // n_heads
    ks = jax.random.split(key, 12)

    def lin(k, out_d, in_d):
        return jax.random.normal(k, (out_d, in_d), jnp.float32) / math.sqrt(in_d)

    def vec(k, d):
        return jax.random.normal(k, (1, d), jnp.float32) * 0.02

    return dict(
        wq=lin(ks[0], n_heads * d_k, d_model), bq=vec(ks[1], n_heads * d_k),
        wk=lin(ks[2], n_heads * d_k, d_model), bk=vec(ks[3], n_heads * d_k),
        wv=lin(ks[4], n_heads * d_v, d_model), bv=vec(ks[5], n_heads * d_v),
        wo=lin(ks[6], d_model, n_heads * d_v), bo=vec(ks[7], d_model),
        g1=jnp.ones((1, d_model), jnp.float32),
        be1=jnp.zeros((1, d_model), jnp.float32),
        w1=lin(ks[8], d_ff, d_model), b1=vec(ks[9], d_ff),
        w2=lin(ks[10], d_model, d_ff), b2=vec(ks[11], d_model),
        g2=jnp.ones((1, d_model), jnp.float32),
        be2=jnp.zeros((1, d_model), jnp.float32),
    )


# Pure-JAX f32 / exact-GELU reference of the PyTorch forward (sanity check;
# kernel uses bf16 I/O + matmuls, tanh-GELU and approx reciprocal).
def _reference(src, params, *, n_heads, local_ws, eps=1e-5):
    B, L, D = src.shape
    H, dk, dv = n_heads, D // n_heads, D // n_heads
    scale = float(dk) ** -0.5
    x = src.reshape(B * L, D)
    q = (x @ params["wq"].T + params["bq"]).reshape(B, L, H, dk).transpose(0, 2, 1, 3)
    k = (x @ params["wk"].T + params["bk"]).reshape(B, L, H, dk).transpose(0, 2, 1, 3)
    v = (x @ params["wv"].T + params["bv"]).reshape(B, L, H, dv).transpose(0, 2, 1, 3)
    s = jnp.einsum("bhqd,bhkd->bhqk", q, k) * scale
    idx = jnp.arange(L)
    local = jnp.abs(idx[:, None] - idx[None, :]) <= (local_ws // 2)
    s = jnp.where(local[None, None], -jnp.inf, s)
    p = jax.nn.softmax(s, axis=-1)
    ctx = jnp.einsum("bhqk,bhkd->bhqd", p, v)
    ctx = ctx.transpose(0, 2, 1, 3).reshape(B * L, H * dv)
    attn = ctx @ params["wo"].T + params["bo"]

    def bn(z, g, b):
        m = z.mean(0, keepdims=True)
        var = ((z - m) ** 2).mean(0, keepdims=True)
        return (z - m) * jax.lax.rsqrt(var + eps) * g + b

    s1 = bn(x + attn, params["g1"], params["be1"])
    hdn = jax.nn.gelu(s1 @ params["w1"].T + params["b1"], approximate=False)
    s2 = bn(s1 + (hdn @ params["w2"].T + params["b2"]),
            params["g2"], params["be2"])
    return s2.reshape(B, L, D)


if __name__ == "__main__":
    key = jax.random.PRNGKey(0)
    k_src, k_par = jax.random.split(key)

    B, L, D, H, D_FF, LOCAL_WS = 2, 16, 32, 4, 64, 3   # q_len=16, d_model=32
    src = jax.random.normal(k_src, (B, L, D), jnp.float32)
    params = init_params(k_par, D, H, D_FF)

    out = tst_encoder_layer(src, params, n_heads=H, local_ws=LOCAL_WS)
    out = jax.block_until_ready(out)

    assert out.shape == (B, L, D)
    assert bool(jnp.isfinite(out).all())

    # loose sanity check vs. the f32 reference (bf16 activation I/O + matmuls,
    # tanh-GELU and approx reciprocal in the kernel -> generous tolerance)
    ref = _reference(src, params, n_heads=H, local_ws=LOCAL_WS)
    err = float(jnp.max(jnp.abs(out - ref)))
    assert err < 0.35, f"max abs err too large: {err}"

    print("KERNEL_OK")
</pallas_src>

<mosaic_0001>
module attributes {stable_mosaic.version = 11 : i64} {
  func.func @_attn_kernel(%arg0: i32, %arg1: memref<1x16x32xbf16, #tpu.memory_space<vmem>>, %arg2: memref<32x96xbf16, #tpu.memory_space<vmem>>, %arg3: memref<1x96xf32, #tpu.memory_space<vmem>>, %arg4: memref<32x32xbf16, #tpu.memory_space<vmem>>, %arg5: memref<1x32xf32, #tpu.memory_space<vmem>>, %arg6: memref<1x16x32xbf16, #tpu.memory_space<vmem>>, %arg7: memref<1x1x32xf32, #tpu.memory_space<vmem>>, %arg8: memref<1x1x32xf32, #tpu.memory_space<vmem>>) attributes {dimension_semantics = [#tpu.dimension_semantics<parallel>], iteration_bounds = array<i64: 2>, scalar_prefetch = 0 : i64, scratch_operands = 0 : i64, tpu.core_type = #tpu.core_type<tc>, window_params = [{transform_indices = @transform_0, window_bounds = array<i64: 1, 16, 32>}, {pipeline_mode = #tpu.pipeline_mode<synchronous>, transform_indices = @transform_1, window_bounds = array<i64: 32, 96>}, {pipeline_mode = #tpu.pipeline_mode<synchronous>, transform_indices = @transform_2, window_bounds = array<i64: 1, 96>}, {pipeline_mode = #tpu.pipeline_mode<synchronous>, transform_indices = @transform_3, window_bounds = array<i64: 32, 32>}, {pipeline_mode = #tpu.pipeline_mode<synchronous>, transform_indices = @transform_4, window_bounds = array<i64: 1, 32>}, {transform_indices = @transform_5, window_bounds = array<i64: 1, 16, 32>}, {transform_indices = @transform_6, window_bounds = array<i64: 1, 1, 32>}, {transform_indices = @transform_7, window_bounds = array<i64: 1, 1, 32>}]} {
    %c0 = arith.constant 0 : index
    %c0_0 = arith.constant 0 : index
    %c0_1 = arith.constant 0 : index
    %0 = vector.load %arg1[%c0, %c0_0, %c0_1] : memref<1x16x32xbf16, #tpu.memory_space<vmem>>, vector<1x16x32xbf16>
    %1 = vector.shape_cast %0 : vector<1x16x32xbf16> to vector<16x32xbf16>
    %2 = arith.extf %1 : vector<16x32xbf16> to vector<16x32xf32>
    %c0_2 = arith.constant 0 : index
    %c0_3 = arith.constant 0 : index
    %c0_4 = arith.constant 0 : index
    %3 = vector.load %arg1[%c0_2, %c0_3, %c0_4] : memref<1x16x32xbf16, #tpu.memory_space<vmem>>, vector<1x16x32xbf16>
    %4 = vector.shape_cast %3 : vector<1x16x32xbf16> to vector<16x32xbf16>
    %c0_5 = arith.constant 0 : index
    %c0_6 = arith.constant 0 : index
    %5 = vector.load %arg2[%c0_5, %c0_6] : memref<32x96xbf16, #tpu.memory_space<vmem>>, vector<32x96xbf16>
    %cst = arith.constant dense<0.000000e+00> : vector<16x96xf32>
    %6 = tpu.matmul %4, %5, %cst {dimension_numbers = #tpu.dot_dimension_numbers<[1], [0], [0], [1], [0, 0, 1, 1], [], []>} : vector<16x32xbf16>, vector<32x96xbf16>, vector<16x96xf32> -> vector<16x96xf32>
    %c0_7 = arith.constant 0 : index
    %c0_8 = arith.constant 0 : index
    %7 = vector.load %arg3[%c0_7, %c0_8] : memref<1x96xf32, #tpu.memory_space<vmem>>, vector<1x96xf32>
    %8 = vector.broadcast %7 : vector<1x96xf32> to vector<16x96xf32>
    %9 = arith.addf %6, %8 : vector<16x96xf32>
    %10 = vector.extract_strided_slice %9 {offsets = [0, 0], sizes = [16, 8], strides = [1, 1]} : vector<16x96xf32> to vector<16x8xf32>
    %11 = vector.extract_strided_slice %9 {offsets = [0, 8], sizes = [16, 8], strides = [1, 1]} : vector<16x96xf32> to vector<16x8xf32>
    %12 = vector.extract_strided_slice %9 {offsets = [0, 16], sizes = [16, 8], strides = [1, 1]} : vector<16x96xf32> to vector<16x8xf32>
    %13 = vector.extract_strided_slice %9 {offsets = [0, 24], sizes = [16, 8], strides = [1, 1]} : vector<16x96xf32> to vector<16x8xf32>
    %14 = vector.shape_cast %10 : vector<16x8xf32> to vector<1x16x8xf32>
    %15 = vector.shape_cast %11 : vector<16x8xf32> to vector<1x16x8xf32>
    %16 = vector.shape_cast %12 : vector<16x8xf32> to vector<1x16x8xf32>
    %17 = vector.shape_cast %13 : vector<16x8xf32> to vector<1x16x8xf32>
    %18 = tpu.concatenate %14, %15, %16, %17 in 0 : vector<1x16x8xf32>, vector<1x16x8xf32>, vector<1x16x8xf32>, vector<1x16x8xf32> -> vector<4x16x8xf32>
    %19 = arith.truncf %18 : vector<4x16x8xf32> to vector<4x16x8xbf16>
    %20 = vector.extract_strided_slice %9 {offsets = [0, 32], sizes = [16, 8], strides = [1, 1]} : vector<16x96xf32> to vector<16x8xf32>
    %21 = vector.extract_strided_slice %9 {offsets = [0, 40], sizes = [16, 8], strides = [1, 1]} : vector<16x96xf32> to vector<16x8xf32>
    %22 = vector.extract_strided_slice %9 {offsets = [0, 48], sizes = [16, 8], strides = [1, 1]} : vector<16x96xf32> to vector<16x8xf32>
    %23 = vector.extract_strided_slice %9 {offsets = [0, 56], sizes = [16, 8], strides = [1, 1]} : vector<16x96xf32> to vector<16x8xf32>
    %24 = vector.shape_cast %20 : vector<16x8xf32> to vector<1x16x8xf32>
    %25 = vector.shape_cast %21 : vector<16x8xf32> to vector<1x16x8xf32>
    %26 = vector.shape_cast %22 : vector<16x8xf32> to vector<1x16x8xf32>
    %27 = vector.shape_cast %23 : vector<16x8xf32> to vector<1x16x8xf32>
    %28 = tpu.concatenate %24, %25, %26, %27 in 0 : vector<1x16x8xf32>, vector<1x16x8xf32>, vector<1x16x8xf32>, vector<1x16x8xf32> -> vector<4x16x8xf32>
    %29 = arith.truncf %28 : vector<4x16x8xf32> to vector<4x16x8xbf16>
    %30 = vector.extract_strided_slice %9 {offsets = [0, 64], sizes = [16, 8], strides = [1, 1]} : vector<16x96xf32> to vector<16x8xf32>
    %31 = vector.extract_strided_slice %9 {offsets = [0, 72], sizes = [16, 8], strides = [1, 1]} : vector<16x96xf32> to vector<16x8xf32>
    %32 = vector.extract_strided_slice %9 {offsets = [0, 80], sizes = [16, 8], strides = [1, 1]} : vector<16x96xf32> to vector<16x8xf32>
    %33 = vector.extract_strided_slice %9 {offsets = [0, 88], sizes = [16, 8], strides = [1, 1]} : vector<16x96xf32> to vector<16x8xf32>
    %34 = vector.shape_cast %30 : vector<16x8xf32> to vector<1x16x8xf32>
    %35 = vector.shape_cast %31 : vector<16x8xf32> to vector<1x16x8xf32>
    %36 = vector.shape_cast %32 : vector<16x8xf32> to vector<1x16x8xf32>
    %37 = vector.shape_cast %33 : vector<16x8xf32> to vector<1x16x8xf32>
    %38 = tpu.concatenate %34, %35, %36, %37 in 0 : vector<1x16x8xf32>, vector<1x16x8xf32>, vector<1x16x8xf32>, vector<1x16x8xf32> -> vector<4x16x8xf32>
    %39 = arith.truncf %38 : vector<4x16x8xf32> to vector<4x16x8xbf16>
    "tpu.trace_start"() <{level = 10 : i32, message = "hqd,hkd->hqk"}> : () -> ()
    %cst_9 = arith.constant dense<0.000000e+00> : vector<4x16x16xf32>
    %40 = tpu.matmul %19, %29, %cst_9 {dimension_numbers = #tpu.dot_dimension_numbers<[2], [2], [1], [1], [0, 0, 0, 1, 1, 1], [0], [0]>} : vector<4x16x8xbf16>, vector<4x16x8xbf16>, vector<4x16x16xf32> -> vector<4x16x16xf32>
    "tpu.trace_stop"() : () -> ()
    %41 = tpu.iota {dimensions = array<i32: 0>} : vector<16x16xi32>
    %42 = tpu.iota {dimensions = array<i32: 1>} : vector<16x16xi32>
    %43 = arith.subi %41, %42 : vector<16x16xi32>
    %44 = math.absi %43 : vector<16x16xi32>
    %c1_i32 = arith.constant 1 : i32
    %45 = vector.broadcast %c1_i32 : i32 to vector<16x16xi32>
    %46 = arith.cmpi sle, %44, %45 : vector<16x16xi32>
    %cst_10 = arith.constant -1.000000e+30 : f32
    %cst_11 = arith.constant 0.000000e+00 : f32
    %47 = vector.broadcast %cst_10 : f32 to vector<16x16xf32>
    %48 = vector.broadcast %cst_11 : f32 to vector<16x16xf32>
    %49 = arith.select %46, %47, %48 : vector<16x16xi1>, vector<16x16xf32>
    %50 = vector.shape_cast %49 : vector<16x16xf32> to vector<1x16x16xf32>
    %51 = vector.broadcast %50 : vector<1x16x16xf32> to vector<4x16x16xf32>
    %52 = arith.addf %40, %51 : vector<4x16x16xf32>
    %cst_12 = arith.constant dense<0xFF800000> : vector<4x16xf32>
    %53 = vector.multi_reduction <maximumf>, %52, %cst_12 [2] : vector<4x16x16xf32> to vector<4x16xf32>
    %54 = vector.shape_cast %53 : vector<4x16xf32> to vector<4x16x1xf32>
    %55 = vector.broadcast %54 : vector<4x16x1xf32> to vector<4x16x16xf32>
    %56 = arith.subf %52, %55 : vector<4x16x16xf32>
    %57 = math.exp %56 : vector<4x16x16xf32>
    %cst_13 = arith.constant dense<0.000000e+00> : vector<4x16xf32>
    %58 = vector.multi_reduction <add>, %57, %cst_13 [2] : vector<4x16x16xf32> to vector<4x16xf32>
    %59 = vector.shape_cast %58 : vector<4x16xf32> to vector<4x16x1xf32>
    %60 = tpu.reciprocal %59 {approx = true} : vector<4x16x1xf32> -> vector<4x16x1xf32>
    %61 = vector.broadcast %60 : vector<4x16x1xf32> to vector<4x16x16xf32>
    %62 = arith.mulf %57, %61 : vector<4x16x16xf32>
    %63 = arith.truncf %62 : vector<4x16x16xf32> to vector<4x16x16xbf16>
    "tpu.trace_start"() <{level = 10 : i32, message = "hqk,hkd->hqd"}> : () -> ()
    %cst_14 = arith.constant dense<0.000000e+00> : vector<4x16x8xf32>
    %64 = tpu.matmul %63, %39, %cst_14 {dimension_numbers = #tpu.dot_dimension_numbers<[2], [1], [1], [2], [0, 0, 0, 1, 1, 2], [0], [0]>} : vector<4x16x16xbf16>, vector<4x16x8xbf16>, vector<4x16x8xf32> -> vector<4x16x8xf32>
    "tpu.trace_stop"() : () -> ()
    %65 = vector.extract_strided_slice %64 {offsets = [0, 0, 0], sizes = [1, 16, 8], strides = [1, 1, 1]} : vector<4x16x8xf32> to vector<1x16x8xf32>
    %66 = vector.shape_cast %65 : vector<1x16x8xf32> to vector<16x8xf32>
    %67 = vector.extract_strided_slice %64 {offsets = [1, 0, 0], sizes = [1, 16, 8], strides = [1, 1, 1]} : vector<4x16x8xf32> to vector<1x16x8xf32>
    %68 = vector.shape_cast %67 : vector<1x16x8xf32> to vector<16x8xf32>
    %69 = vector.extract_strided_slice %64 {offsets = [2, 0, 0], sizes = [1, 16, 8], strides = [1, 1, 1]} : vector<4x16x8xf32> to vector<1x16x8xf32>
    %70 = vector.shape_cast %69 : vector<1x16x8xf32> to vector<16x8xf32>
    %71 = vector.extract_strided_slice %64 {offsets = [3, 0, 0], sizes = [1, 16, 8], strides = [1, 1, 1]} : vector<4x16x8xf32> to vector<1x16x8xf32>
    %72 = vector.shape_cast %71 : vector<1x16x8xf32> to vector<16x8xf32>
    %73 = tpu.concatenate %66, %68, %70, %72 in 1 : vector<16x8xf32>, vector<16x8xf32>, vector<16x8xf32>, vector<16x8xf32> -> vector<16x32xf32>
    %74 = arith.truncf %73 : vector<16x32xf32> to vector<16x32xbf16>
    %c0_15 = arith.constant 0 : index
    %c0_16 = arith.constant 0 : index
    %75 = vector.load %arg4[%c0_15, %c0_16] : memref<32x32xbf16, #tpu.memory_space<vmem>>, vector<32x32xbf16>
    %cst_17 = arith.constant dense<0.000000e+00> : vector<16x32xf32>
    %76 = tpu.matmul %74, %75, %cst_17 {dimension_numbers = #tpu.dot_dimension_numbers<[1], [0], [0], [1], [0, 0, 1, 1], [], []>} : vector<16x32xbf16>, vector<32x32xbf16>, vector<16x32xf32> -> vector<16x32xf32>
    %c0_18 = arith.constant 0 : index
    %c0_19 = arith.constant 0 : index
    %77 = vector.load %arg5[%c0_18, %c0_19] : memref<1x32xf32, #tpu.memory_space<vmem>>, vector<1x32xf32>
    %78 = vector.broadcast %77 : vector<1x32xf32> to vector<16x32xf32>
    %79 = arith.addf %76, %78 : vector<16x32xf32>
    %80 = arith.addf %2, %79 : vector<16x32xf32>
    %81 = arith.truncf %80 : vector<16x32xf32> to vector<16x32xbf16>
    %c0_20 = arith.constant 0 : index
    %c0_21 = arith.constant 0 : index
    %c0_22 = arith.constant 0 : index
    %82 = vector.load %arg6[%c0_20, %c0_21, %c0_22] : memref<1x16x32xbf16, #tpu.memory_space<vmem>>, vector<1x16x32xbf16>
    %83 = vector.shape_cast %82 : vector<1x16x32xbf16> to vector<16x32xbf16>
    %84 = vector.shape_cast %81 : vector<16x32xbf16> to vector<1x16x32xbf16>
    tpu.vector_store %arg6[%c0_20, %c0_21, %c0_22], %84 {strides = array<i32>} : memref<1x16x32xbf16, #tpu.memory_space<vmem>>, vector<1x16x32xbf16>,
    %cst_23 = arith.constant dense<0.000000e+00> : vector<32xf32>
    %85 = vector.multi_reduction <add>, %80, %cst_23 [0] : vector<16x32xf32> to vector<32xf32>
    %86 = vector.shape_cast %85 : vector<32xf32> to vector<1x32xf32>
    %c0_24 = arith.constant 0 : index
    %c0_25 = arith.constant 0 : index
    %c0_26 = arith.constant 0 : index
    %87 = vector.load %arg7[%c0_24, %c0_25, %c0_26] : memref<1x1x32xf32, #tpu.memory_space<vmem>>, vector<1x1x32xf32>
    %88 = vector.shape_cast %87 : vector<1x1x32xf32> to vector<1x32xf32>
    %89 = vector.shape_cast %86 : vector<1x32xf32> to vector<1x1x32xf32>
    tpu.vector_store %arg7[%c0_24, %c0_25, %c0_26], %89 {strides = array<i32>} : memref<1x1x32xf32, #tpu.memory_space<vmem>>, vector<1x1x32xf32>,
    %90 = arith.mulf %80, %80 : vector<16x32xf32>
    %cst_27 = arith.constant dense<0.000000e+00> : vector<32xf32>
    %91 = vector.multi_reduction <add>, %90, %cst_27 [0] : vector<16x32xf32> to vector<32xf32>
    %92 = vector.shape_cast %91 : vector<32xf32> to vector<1x32xf32>
    %c0_28 = arith.constant 0 : index
    %c0_29 = arith.constant 0 : index
    %c0_30 = arith.constant 0 : index
    %93 = vector.load %arg8[%c0_28, %c0_29, %c0_30] : memref<1x1x32xf32, #tpu.memory_space<vmem>>, vector<1x1x32xf32>
    %94 = vector.shape_cast %93 : vector<1x1x32xf32> to vector<1x32xf32>
    %95 = vector.shape_cast %92 : vector<1x32xf32> to vector<1x1x32xf32>
    tpu.vector_store %arg8[%c0_28, %c0_29, %c0_30], %95 {strides = array<i32>} : memref<1x1x32xf32, #tpu.memory_space<vmem>>, vector<1x1x32xf32>,
    return
  }
  func.func @transform_0(%arg0: i32) -> (i32, i32, i32) {
    %c0_i32 = arith.constant 0 : i32
    %c0_i32_0 = arith.constant 0 : i32
    %c0_i32_1 = arith.constant 0 : i32
    return %arg0, %c0_i32, %c0_i32_0 : i32, i32, i32
  }
  func.func @transform_1(%arg0: i32) -> (i32, i32) {
    %c0_i32 = arith.constant 0 : i32
    %c0_i32_0 = arith.constant 0 : i32
    %c0_i32_1 = arith.constant 0 : i32
    return %c0_i32, %c0_i32_0 : i32, i32
  }
  func.func @transform_2(%arg0: i32) -> (i32, i32) {
    %c0_i32 = arith.constant 0 : i32
    %c0_i32_0 = arith.constant 0 : i32
    %c0_i32_1 = arith.constant 0 : i32
    return %c0_i32, %c0_i32_0 : i32, i32
  }
  func.func @transform_3(%arg0: i32) -> (i32, i32) {
    %c0_i32 = arith.constant 0 : i32
    %c0_i32_0 = arith.constant 0 : i32
    %c0_i32_1 = arith.constant 0 : i32
    return %c0_i32, %c0_i32_0 : i32, i32
  }
  func.func @transform_4(%arg0: i32) -> (i32, i32) {
    %c0_i32 = arith.constant 0 : i32
    %c0_i32_0 = arith.constant 0 : i32
    %c0_i32_1 = arith.constant 0 : i32
    return %c0_i32, %c0_i32_0 : i32, i32
  }
  func.func @transform_5(%arg0: i32) -> (i32, i32, i32) {
    %c0_i32 = arith.constant 0 : i32
    %c0_i32_0 = arith.constant 0 : i32
    %c0_i32_1 = arith.constant 0 : i32
    return %arg0, %c0_i32, %c0_i32_0 : i32, i32, i32
  }
  func.func @transform_6(%arg0: i32) -> (i32, i32, i32) {
    %c0_i32 = arith.constant 0 : i32
    %c0_i32_0 = arith.constant 0 : i32
    %c0_i32_1 = arith.constant 0 : i32
    return %arg0, %c0_i32, %c0_i32_0 : i32, i32, i32
  }
  func.func @transform_7(%arg0: i32) -> (i32, i32, i32) {
    %c0_i32 = arith.constant 0 : i32
    %c0_i32_0 = arith.constant 0 : i32
    %c0_i32_1 = arith.constant 0 : i32
    return %arg0, %c0_i32, %c0_i32_0 : i32, i32, i32
  }
}

</mosaic_0001>

<llo_original>
// kernel: tpu_custom_call.1
$region0: #{tpu_custom_call.1}
  #allocation0 [shape = 'u32[]', space=smem, size = 0x4, offset = 0x4, fixed_abs, tag = 'smem constant byte address 0x4 - core index']
  #allocation1 [shape = 'u32[144,128]{1,0:T(1,128)}', space=vmem, size = 0x12000, scoped, tag = 'internal scratch']
  %s0 = inlined_call_operand.hbm [shape: bf16[2,16,32], index: 0, kind: input, shape index: {}]
  %s1 = inlined_call_operand.hbm [shape: bf16[32,96], index: 1, kind: input, shape index: {}]
  %s2 = inlined_call_operand.vmem [shape: f32[1,96], index: 2, kind: input, shape index: {}]
  %s3 = inlined_call_operand.hbm [shape: bf16[32,32], index: 3, kind: input, shape index: {}]
  %s4 = inlined_call_operand.vmem [shape: f32[1,32], index: 4, kind: input, shape index: {}]
  %s5 = inlined_call_operand.hbm [shape: bf16[2,16,32], index: 5, kind: output, shape index: {0}]
  %s6 = inlined_call_operand.hbm [shape: f32[2,1,32], index: 6, kind: output, shape index: {1}]
  %s7 = inlined_call_operand.hbm [shape: f32[2,1,32], index: 7, kind: output, shape index: {2}]
  %8 = xla_tuple %s5, %s6, %s7
  %s9 = sld [smem:[#allocation0]]
  $region81: #{tpu_custom_call.1} parent=0
    _
  %s11 = ssub.s32 1, %s9
  %s12 = scalar_select 0, %s11, %s9
  $region1: #{tpu_custom_call.1} parent=0
    #allocation2 [shape = 'u8[8192]{0}', space=vmem, size = 0x2000, scoped, tag = 'input window, operand 0']
    #allocation3 [shape = 's32[2]{0}', space=sflag, size = 0x8, scoped, tag = 'scoped memory for tpu_custom_call.1']
    #allocation4 [shape = 's32[2]{0}', space=sflag, size = 0x8, scoped, tag = 'scoped memory for tpu_custom_call.1']
    #allocation5 [shape = 'u8[8192]{0}', space=vmem, size = 0x2000, scoped, tag = 'input window, operand 1, single buffered']
    #allocation6 [shape = 's32[1]{0}', space=sflag, size = 0x4, scoped, tag = 'scoped memory for tpu_custom_call.1']
    #allocation7 [shape = 'u8[8192]{0}', space=vmem, size = 0x2000, scoped, tag = 'input window, operand 3, single buffered']
    #allocation8 [shape = 'u8[8192]{0}', space=vmem, size = 0x2000, scoped, tag = 'output window, operand 0']
    #allocation9 [shape = 'u8[1024]{0}', space=vmem, size = 0x400, scoped, tag = 'output window, operand 1']
    #allocation10 [shape = 's32[2]{0}', space=sflag, size = 0x8, scoped, tag = 'scoped memory for tpu_custom_call.1']
    #allocation11 [shape = 'u8[1024]{0}', space=vmem, size = 0x400, scoped, tag = 'output window, operand 2']
    %13 = vsyncpa [#allocation3], 0
    %s14 = scalar_lea.sflag [#allocation3], 1
    %15 = vsyncpa %s14, 0
    %16 = vsyncpa [#allocation6], 0
    %17 = vsyncpa [#allocation4], 0
    %s18 = scalar_lea.sflag [#allocation4], 1
    %19 = vsyncpa %s18, 0
    %20 = vsyncpa [#allocation10], 0
    %s21 = scalar_lea.sflag [#allocation10], 1
    %22 = vsyncpa %s21, 0
    loop: start=0, step=1, limit=4
    $region2: #{tpu_custom_call.1} parent=1 // loop_pre_header
      _
    $region3: #{tpu_custom_call.1} parent=1 // loop_header
      %s24 = sphi 0, %s28
      %p25 = scmp.ge.s32.totalorder %s24, 4
      %s34 = sphi 0, %s36
      %s37 = sphi 0, %s34
      %s38 = sphi 0, %s37
      %s54 = sphi 0, %s38
      %s58 = sphi 0, %s58
      %s60 = sphi 0, %s58
      %s61 = sphi 0, %s60
      %s75 = sphi 0, %s61
      %s79 = sphi 0, %s79
      %s81 = sphi 0, %s79
      %s82 = sphi 0, %s81
      %s96 = sphi 0, %s82
      %s100 = sphi 0, %s100
      %s102 = sphi 0, %s100
      %s103 = sphi 0, %s102
      %s117 = sphi 0, %s103
      %s121 = sphi 0, %s121
      %s123 = sphi 0, %s121
      %s124 = sphi 0, %s123
      %s138 = sphi 0, %s124
      %s144 = sphi 0, %s146
      %s147 = sphi 0, %s144
      %s148 = sphi 0, %s147
      %s164 = sphi 0, %s148
      %s170 = sphi 0, %s172
      %s173 = sphi 0, %s170
      %s174 = sphi 0, %s173
      %s190 = sphi 0, %s174
      %s196 = sphi 0, %s198
      %s199 = sphi 0, %s196
      %s200 = sphi 0, %s199
      %s216 = sphi 0, %s200
    $region4: #{tpu_custom_call.1} parent=1 // loop_header_branch
      %27 = sbr.rel (%p25) target = $region8
    $region5: #{tpu_custom_call.1} parent=1 // loop_body
      %s29 = ssub.s32 %s24, 1
      %s30 = ssub.s32 %s24, 2
      %s31 = sadd.s32 %s24, 1
      %s32 = ssub.s32 %s24, %s31
      %p33 = scmp.eq.s32.totalorder %s32, 0
      %s35 = sadd.s32 %s34, 1
      %s36 = scalar_select %p33, %s34, %s35
      %p39 = pneg %p33
      %p40 = scmp.eq.s32.totalorder %s24, 1
      %p41 = por %p39, %p40
      %p42 = scmp.ne.s32.totalorder %s34, %s37
      %p43 = scmp.eq.s32.totalorder %s24, 0
      %p44 = por %p42, %p43
      %p45 = scmp.ne.s32.totalorder %s34, %s37
      %p46 = scmp.eq.s32.totalorder %s29, 1
      %p47 = por %p45, %p46
      %p48 = scmp.ne.s32.totalorder %s37, %s38
      %p49 = scmp.eq.s32.totalorder %s29, 0
      %p50 = por %p48, %p49
      %p51 = scmp.ne.s32.totalorder %s37, %s38
      %p52 = scmp.eq.s32.totalorder %s30, 1
      %p53 = por %p51, %p52
      %p55 = scmp.ne.s32.totalorder %s38, %s54
      %p56 = scmp.eq.s32.totalorder %s30, 0
      %p57 = por %p55, %p56
      %s59 = sadd.s32 %s58, 1
      %p62 = scmp.eq.s32.totalorder %s24, 1
      %p63 = scmp.ne.s32.totalorder %s58, %s60
      %p64 = scmp.eq.s32.totalorder %s24, 0
      %p65 = por %p63, %p64
      %p66 = scmp.ne.s32.totalorder %s58, %s60
      %p67 = scmp.eq.s32.totalorder %s29, 1
      %p68 = por %p66, %p67
      %p69 = scmp.ne.s32.totalorder %s60, %s61
      %p70 = scmp.eq.s32.totalorder %s29, 0
      %p71 = por %p69, %p70
      %p72 = scmp.ne.s32.totalorder %s60, %s61
      %p73 = scmp.eq.s32.totalorder %s30, 1
      %p74 = por %p72, %p73
      %p76 = scmp.ne.s32.totalorder %s61, %s75
      %p77 = scmp.eq.s32.totalorder %s30, 0
      %p78 = por %p76, %p77
      %s80 = sadd.s32 %s79, 1
      %p83 = scmp.eq.s32.totalorder %s24, 1
      %p84 = scmp.ne.s32.totalorder %s79, %s81
      %p85 = scmp.eq.s32.totalorder %s24, 0
      %p86 = por %p84, %p85
      %p87 = scmp.ne.s32.totalorder %s79, %s81
      %p88 = scmp.eq.s32.totalorder %s29, 1
      %p89 = por %p87, %p88
      %p90 = scmp.ne.s32.totalorder %s81, %s82
      %p91 = scmp.eq.s32.totalorder %s29, 0
      %p92 = por %p90, %p91
      %p93 = scmp.ne.s32.totalorder %s81, %s82
      %p94 = scmp.eq.s32.totalorder %s30, 1
      %p95 = por %p93, %p94
      %p97 = scmp.ne.s32.totalorder %s82, %s96
      %p98 = scmp.eq.s32.totalorder %s30, 0
      %p99 = por %p97, %p98
      %s101 = sadd.s32 %s100, 1
      %p104 = scmp.eq.s32.totalorder %s24, 1
      %p105 = scmp.ne.s32.totalorder %s100, %s102
      %p106 = scmp.eq.s32.totalorder %s24, 0
      %p107 = por %p105, %p106
      %p108 = scmp.ne.s32.totalorder %s100, %s102
      %p109 = scmp.eq.s32.totalorder %s29, 1
      %p110 = por %p108, %p109
      %p111 = scmp.ne.s32.totalorder %s102, %s103
      %p112 = scmp.eq.s32.totalorder %s29, 0
      %p113 = por %p111, %p112
      %p114 = scmp.ne.s32.totalorder %s102, %s103
      %p115 = scmp.eq.s32.totalorder %s30, 1
      %p116 = por %p114, %p115
      %p118 = scmp.ne.s32.totalorder %s103, %s117
      %p119 = scmp.eq.s32.totalorder %s30, 0
      %p120 = por %p118, %p119
      %s122 = sadd.s32 %s121, 1
      %p125 = scmp.eq.s32.totalorder %s24, 1
      %p126 = scmp.ne.s32.totalorder %s121, %s123
      %p127 = scmp.eq.s32.totalorder %s24, 0
      %p128 = por %p126, %p127
      %p129 = scmp.ne.s32.totalorder %s121, %s123
      %p130 = scmp.eq.s32.totalorder %s29, 1
      %p131 = por %p129, %p130
      %p132 = scmp.ne.s32.totalorder %s123, %s124
      %p133 = scmp.eq.s32.totalorder %s29, 0
      %p134 = por %p132, %p133
      %p135 = scmp.ne.s32.totalorder %s123, %s124
      %p136 = scmp.eq.s32.totalorder %s30, 1
      %p137 = por %p135, %p136
      %p139 = scmp.ne.s32.totalorder %s124, %s138
      %p140 = scmp.eq.s32.totalorder %s30, 0
      %p141 = por %p139, %p140
      %s142 = ssub.s32 %s24, %s31
      %p143 = scmp.eq.s32.totalorder %s142, 0
      %s145 = sadd.s32 %s144, 1
      %s146 = scalar_select %p143, %s144, %s145
      %p149 = pneg %p143
      %p150 = scmp.eq.s32.totalorder %s24, 1
      %p151 = por %p149, %p150
      %p152 = scmp.ne.s32.totalorder %s144, %s147
      %p153 = scmp.eq.s32.totalorder %s24, 0
      %p154 = por %p152, %p153
      %p155 = scmp.ne.s32.totalorder %s144, %s147
      %p156 = scmp.eq.s32.totalorder %s29, 1
      %p157 = por %p155, %p156
      %p158 = scmp.ne.s32.totalorder %s147, %s148
      %p159 = scmp.eq.s32.totalorder %s29, 0
      %p160 = por %p158, %p159
      %p161 = scmp.ne.s32.totalorder %s147, %s148
      %p162 = scmp.eq.s32.totalorder %s30, 1
      %p163 = por %p161, %p162
      %p165 = scmp.ne.s32.totalorder %s148, %s164
      %p166 = scmp.eq.s32.totalorder %s30, 0
      %p167 = por %p165, %p166
      %s168 = ssub.s32 %s24, %s31
      %p169 = scmp.eq.s32.totalorder %s168, 0
      %s171 = sadd.s32 %s170, 1
      %s172 = scalar_select %p169, %s170, %s171
      %p175 = pneg %p169
      %p176 = scmp.eq.s32.totalorder %s24, 1
      %p177 = por %p175, %p176
      %p178 = scmp.ne.s32.totalorder %s170, %s173
      %p179 = scmp.eq.s32.totalorder %s24, 0
      %p180 = por %p178, %p179
      %p181 = scmp.ne.s32.totalorder %s170, %s173
      %p182 = scmp.eq.s32.totalorder %s29, 1
      %p183 = por %p181, %p182
      %p184 = scmp.ne.s32.totalorder %s173, %s174
      %p185 = scmp.eq.s32.totalorder %s29, 0
      %p186 = por %p184, %p185
      %p187 = scmp.ne.s32.totalorder %s173, %s174
      %p188 = scmp.eq.s32.totalorder %s30, 1
      %p189 = por %p187, %p188
      %p191 = scmp.ne.s32.totalorder %s174, %s190
      %p192 = scmp.eq.s32.totalorder %s30, 0
      %p193 = por %p191, %p192
      %s194 = ssub.s32 %s24, %s31
      %p195 = scmp.eq.s32.totalorder %s194, 0
      %s197 = sadd.s32 %s196, 1
      %s198 = scalar_select %p195, %s196, %s197
      %p201 = pneg %p195
      %p202 = scmp.eq.s32.totalorder %s24, 1
      %p203 = por %p201, %p202
      %p204 = scmp.ne.s32.totalorder %s196, %s199
      %p205 = scmp.eq.s32.totalorder %s24, 0
      %p206 = por %p204, %p205
      %p207 = scmp.ne.s32.totalorder %s196, %s199
      %p208 = scmp.eq.s32.totalorder %s29, 1
      %p209 = por %p207, %p208
      %p210 = scmp.ne.s32.totalorder %s199, %s200
      %p211 = scmp.eq.s32.totalorder %s29, 0
      %p212 = por %p210, %p211
      %p213 = scmp.ne.s32.totalorder %s199, %s200
      %p214 = scmp.eq.s32.totalorder %s30, 1
      %p215 = por %p213, %p214
      %p217 = scmp.ne.s32.totalorder %s200, %s216
      %p218 = scmp.eq.s32.totalorder %s30, 0
      %p219 = por %p217, %p218
      %p220 = scmp.le.s32.totalorder 1, %s24
      %p221 = scmp.lt.s32.totalorder %s24, 3
      %p222 = pnand %p220, %p221
      %p223 = pneg %p222
      // Predicated region
      $region9: #{tpu_custom_call.1} parent=5 // pred_check
        _
      $region10: #{tpu_custom_call.1} parent=5 // pred_check_branch
        %225 = sbr.rel (%p222) target = $region12
      $region11: #{tpu_custom_call.1} parent=5 // pred_region
        %s226 = ssub.s32 %s24, 1
        // Predicated region
        $region13: #{tpu_custom_call.1} parent=11 // pred_check
          %p227 = pneg %p71
        $region14: #{tpu_custom_call.1} parent=11 // pred_check_branch
          %229 = sbr.rel (%p227) target = $region16
        $region15: #{tpu_custom_call.1} parent=11 // pred_region
          %s231 = ssub.s32 256, 256
          %232 = vsyncadd [#allocation6], %s231
          %s233 = sshll.u32 [#allocation5], 4
          %s234 = int_to_ptr.vmem [resolvable:$true] %s233
          %239 = dma.hbm_to_vmem [thread:$0]  %s1, 256, %s234, [#allocation6], 64, 64, 4
        $region16: #{tpu_custom_call.1} parent=11 // pred_fallthru
          _
        // Predicated region
        $region17: #{tpu_custom_call.1} parent=11 // pred_check
          %p240 = pneg %p92
        $region18: #{tpu_custom_call.1} parent=11 // pred_check_branch
          %242 = sbr.rel (%p240) target = $region20
        $region19: #{tpu_custom_call.1} parent=11 // pred_region
          _
        $region20: #{tpu_custom_call.1} parent=11 // pred_fallthru
          _
        // Predicated region
        $region21: #{tpu_custom_call.1} parent=11 // pred_check
          %p243 = pneg %p113
        $region22: #{tpu_custom_call.1} parent=11 // pred_check_branch
          %245 = sbr.rel (%p243) target = $region24
        $region23: #{tpu_custom_call.1} parent=11 // pred_region
          %s247 = ssub.s32 256, 256
          %248 = vsyncadd [#allocation6], %s247
          %s249 = sshll.u32 [#allocation7], 4
          %s250 = int_to_ptr.vmem [resolvable:$true] %s249
          %255 = dma.hbm_to_vmem [thread:$0]  %s3, 256, %s250, [#allocation6], 64, 64, 4
        $region24: #{tpu_custom_call.1} parent=11 // pred_fallthru
          _
        // Predicated region
        $region25: #{tpu_custom_call.1} parent=11 // pred_check
          %p256 = pneg %p134
        $region26: #{tpu_custom_call.1} parent=11 // pred_check_branch
          %258 = sbr.rel (%p256) target = $region28
        $region27: #{tpu_custom_call.1} parent=11 // pred_region
          _
        $region28: #{tpu_custom_call.1} parent=11 // pred_fallthru
          _
      $region12: #{tpu_custom_call.1} parent=5 // pred_fallthru
        _
      %p259 = scmp.lt.s32.totalorder %s24, 2
      // Predicated region
      $region29: #{tpu_custom_call.1} parent=5 // pred_check
        %p260 = pneg %p259
      $region30: #{tpu_custom_call.1} parent=5 // pred_check_branch
        %262 = sbr.rel (%p260) target = $region32
      $region31: #{tpu_custom_call.1} parent=5 // pred_region
        // Predicated region
        $region33: #{tpu_custom_call.1} parent=31 // pred_check
          %p263 = pneg %p44
        $region34: #{tpu_custom_call.1} parent=31 // pred_check_branch
          %265 = sbr.rel (%p263) target = $region36
        $region35: #{tpu_custom_call.1} parent=31 // pred_region
          %s266 = sand.u32 %s34, 1
          %s267 = scalar_lea.sflag [#allocation3], %s266
          %s268 = sand.u32 %s34, 1
          %s269 = smul.addr %s268, 8
          %s270 = scalar_lea.vmem [#allocation2], %s269
          %s272 = ssub.s32 128, 128
          %273 = vsyncadd %s267, %s272
          %s274 = smul.addr %s24, 2
          %s275 = smul.addr %s274, 64
          %s276 = scalar_lea.hbm %s0, %s275
          %s277 = sshll.u32 %s270, 4
          %s278 = int_to_ptr.vmem [resolvable:$true] %s277
          %283 = dma.hbm_to_vmem [thread:$0]  %s276, 128, %s278, %s267, 64, 64, 4
        $region36: #{tpu_custom_call.1} parent=31 // pred_fallthru
          _
      $region32: #{tpu_custom_call.1} parent=5 // pred_fallthru
        _
      %p284 = scmp.le.s32.totalorder 1, %s24
      %p285 = scmp.lt.s32.totalorder %s24, 3
      %p286 = pnand %p284, %p285
      %p287 = pneg %p286
      // Predicated region
      $region37: #{tpu_custom_call.1} parent=5 // pred_check
        _
      $region38: #{tpu_custom_call.1} parent=5 // pred_check_branch
        %289 = sbr.rel (%p286) target = $region40
      $region39: #{tpu_custom_call.1} parent=5 // pred_region
        %s290 = ssub.s32 %s24, 1
        %s291 = sand.u32 %s37, 1
        %s292 = scalar_lea.sflag [#allocation3], %s291
        %s293 = sand.u32 %s37, 1
        %s294 = smul.addr %s293, 8
        %s295 = scalar_lea.vmem [#allocation2], %s294
        // Predicated region
        $region41: #{tpu_custom_call.1} parent=39 // pred_check
          %p296 = pneg %p50
        $region42: #{tpu_custom_call.1} parent=39 // pred_check_branch
          %298 = sbr.rel (%p296) target = $region44
        $region43: #{tpu_custom_call.1} parent=39 // pred_region
          %299 = dma.done %s292, 128
        $region44: #{tpu_custom_call.1} parent=39 // pred_fallthru
          _
        // Predicated region
        $region45: #{tpu_custom_call.1} parent=39 // pred_check
          %p300 = pneg %p71
        $region46: #{tpu_custom_call.1} parent=39 // pred_check_branch
          %302 = sbr.rel (%p300) target = $region48
        $region47: #{tpu_custom_call.1} parent=39 // pred_region
          %303 = dma.done [#allocation6], 256
        $region48: #{tpu_custom_call.1} parent=39 // pred_fallthru
          _
        // Predicated region
        $region49: #{tpu_custom_call.1} parent=39 // pred_check
          %p304 = pneg %p113
        $region50: #{tpu_custom_call.1} parent=39 // pred_check_branch
          %306 = sbr.rel (%p304) target = $region52
        $region51: #{tpu_custom_call.1} parent=39 // pred_region
          %307 = dma.done [#allocation6], 256
        $region52: #{tpu_custom_call.1} parent=39 // pred_fallthru
          _
        %s308 = sand.u32 %s37, 1
        %s309 = scalar_lea.sflag [#allocation3], %s308
        %s310 = sand.u32 %s37, 1
        %s311 = smul.addr %s310, 8
        %s312 = scalar_lea.vmem [#allocation2], %s311
        %p313 = pneg %p50
        %p314 = pneg %p47
        %p315 = pneg %p71
        %p316 = pneg %p68
        %p317 = pneg %p92
        %p318 = pneg %p89
        %p319 = pneg %p113
        %p320 = pneg %p110
        %p321 = pneg %p134
        %p322 = pneg %p131
        %p323 = pneg %p160
        %p324 = pneg %p157
        %s325 = sand.u32 %s147, 1
        %s326 = scalar_lea.sflag [#allocation4], %s325
        %s327 = sand.u32 %s147, 1
        %s328 = smul.addr %s327, 8
        %s329 = scalar_lea.vmem [#allocation8], %s328
        %p330 = pneg %p186
        %p331 = pneg %p183
        %s332 = sand.u32 %s29, 1
        %s333 = scalar_lea.sflag [#allocation10], %s332
        %s334 = sand.u32 %s173, 1
        %s335 = scalar_lea.vmem [#allocation9], %s334
        %p336 = pneg %p212
        %p337 = pneg %p209
        %s338 = sand.u32 %s29, 1
        %s339 = scalar_lea.sflag [#allocation10], %s338
        %s340 = sand.u32 %s199, 1
        %s341 = scalar_lea.vmem [#allocation11], %s340
        %v343 = vld [vmem:[%s295] sm:$0xf]
        %v344 = vld [vmem:[%s295 + $0x4] sm:$0xf]
        %v345 = vunpack.c.l.bf16 %v343
        %v346 = vunpack.c.l.bf16 %v344
        %v347 = vld [vmem:[#allocation5] sm:$0xf]
        %v348 = vld [vmem:[#allocation5 + $0x4] sm:$0xf]
        %v349 = vld [vmem:[#allocation5 + $0x8] sm:$0xf]
        %v350 = vld [vmem:[#allocation5 + $0xc] sm:$0xf]
        %v351 = vld [vmem:[%s2] sm:$0x1]
        %v353 = vlaneseq
        %v354 = vshrl.u32 %v353, 7
        %v355 = vsub.s32 0, %v354
        %v356 = vrot.slane %v351, %v355
        %v360 = vunpack.c.l.b16 %v343
        %v361 = vunpack.c.l.b16 %v344
        %v362 = vpack.c.b16 %v361, %v360
        %v367 = vunpack.c.l.b16 %v347
        %v368 = vunpack.c.l.b16 %v348
        %v369 = vunpack.c.l.b16 %v349
        %v370 = vunpack.c.l.b16 %v350
        %v371 = vpack.c.b16 %v368, %v367
        %v372 = vpack.c.b16 %v370, %v369
        %vm375 = vcmask 261120
        %v377 = vsel %vm375, %v362, 0
        %379 = vmatprep.subr.bf16.mxu0 0
        %380 = vmatpush1.bf16.msra.mxu0 %v371
        %381 = vmatprep.subr.bf16.mxu0 0
        %382 = vmatpush1.bf16.msra.mxu0 %v372
        %383 = vmatprep.subr.bf16.mxu0 0
        %384 = vmatpush1.bf16.msra.mxu0 0
        %385 = vmatprep.subr.bf16.mxu0 0
        %386 = vmatpush1.bf16.msra.mxu0 0
        %387 = vmatprep.subr.bf16.mxu0 0
        %388 = vmatpush1.bf16.msra.mxu0 0
        %389 = vmatprep.subr.bf16.mxu0 0
        %390 = vmatpush1.bf16.msra.mxu0 0
        %391 = vmatprep.subr.bf16.mxu0 0
        %392 = vmatpush1.bf16.msra.mxu0 0
        %393 = vmatprep.subr.bf16.mxu0 0
        %394 = vmatpush1.bf16.msra.mxu0 0
        %395 = vmatprep.subr.bf16.mxu0 0
        %396 = vmatpush1.bf16.msra.mxu0 0
        %397 = vmatprep.subr.bf16.mxu0 0
        %398 = vmatpush1.bf16.msra.mxu0 0
        %399 = vmatprep.subr.bf16.mxu0 0
        %400 = vmatpush1.bf16.msra.mxu0 0
        %401 = vmatprep.subr.bf16.mxu0 0
        %402 = vmatpush1.bf16.msra.mxu0 0
        %403 = vmatprep.subr.bf16.mxu0 0
        %404 = vmatpush1.bf16.msra.mxu0 0
        %405 = vmatprep.subr.bf16.mxu0 0
        %406 = vmatpush1.bf16.msra.mxu0 0
        %407 = vmatprep.subr.bf16.mxu0 0
        %408 = vmatpush1.bf16.msra.mxu0 0
        %409 = vmatprep.subr.bf16.mxu0 0
        %410 = vmatpush1.bf16.msra.mxu0 0
        %411 = vmatprep.mubr.bf16.mxu0 0
        %412 = vmatmul.mubr.bf16.gmra.mrb[0].mxu0 %v377
        %v413 = vpop.f32.mrb[0].mxu0
        %v414 = vadd.f32 %v356, %v413
        %v415 = vpop.f32.mrb[0].mxu0
        %v416 = vpop.f32.mrb[0].mxu0
        %v417 = vadd.f32 %v356, %v416
        %v418 = vpop.f32.mrb[0].mxu0
        %419 = vdwg.mxu0
        %422 = vrot.lane.b32.xlu0 %v414, 120
        %v423 = vpop.permute.xlu0 %422
        %424 = vrot.lane.b32.xlu0 %v417, 120
        %v425 = vpop.permute.xlu0 %424
        %428 = vrot.lane.b32.xlu0 %v414, 112
        %v429 = vpop.permute.xlu0 %428
        %430 = vrot.lane.b32.xlu0 %v417, 112
        %v431 = vpop.permute.xlu0 %430
        %434 = vrot.lane.b32.xlu0 %v414, 104
        %v435 = vpop.permute.xlu0 %434
        %436 = vrot.lane.b32.xlu0 %v417, 104
        %v437 = vpop.permute.xlu0 %436
        %v440 = vpack.c.bf16 %v417, %v414
        %v441 = vpack.c.bf16 %v425, %v423
        %v442 = vpack.c.bf16 %v431, %v429
        %v443 = vpack.c.bf16 %v437, %v435
        %v444 = vlaneseq
        %v445 = vshrl.u32 %v444, 7
        %v446 = vadd.s32 %v445, 8
        %v447 = vlaneseq
        %v448 = vand.u32 %v447, 127
        %v449 = vsub.s32 %v445, %v448
        %v450 = vsub.s32 %v446, %v448
        %vm451 = vcmp.lt.s32.totalorder %v449, 0
        %v452 = vsub.s32 0, %v449
        %v453 = vsel %vm451, %v452, %v449
        %vm454 = vcmp.lt.s32.totalorder %v450, 0
        %v455 = vsub.s32 0, %v450
        %v456 = vsel %vm454, %v455, %v450
        %vm457 = vcmp.le.s32.totalorder %v453, 1
        %vm458 = vcmp.le.s32.totalorder %v456, 1
        %v459 = vsel %vm457, -1e+30, 0.0
        %v460 = vsel %vm458, -1e+30, 0.0
        %462 = vrot.lane.b32.xlu0 %v440, 96
        %v463 = vpop.permute.xlu0 %462
        %vm464 = vcmask 64512
        %v466 = vsel %vm464, %v440, 0
        %v469 = vsel %vm464, %v463, 0
        %471 = vmatprep.subr.bf16.mxu0 0
        %472 = vmatpush1.bf16.xpose.msra.mxu0 %v469
        %473 = vmatprep.subr.bf16.mxu0 0
        %474 = vmatpush1.bf16.xpose.msra.mxu0 0
        %475 = vmatprep.subr.bf16.mxu0 0
        %476 = vmatpush1.bf16.xpose.msra.mxu0 0
        %477 = vmatprep.subr.bf16.mxu0 0
        %478 = vmatpush1.bf16.xpose.msra.mxu0 0
        %479 = vmatprep.subr.bf16.mxu0 0
        %480 = vmatpush1.bf16.xpose.msra.mxu0 0
        %481 = vmatprep.subr.bf16.mxu0 0
        %482 = vmatpush1.bf16.xpose.msra.mxu0 0
        %483 = vmatprep.subr.bf16.mxu0 0
        %484 = vmatpush1.bf16.xpose.msra.mxu0 0
        %485 = vmatprep.subr.bf16.mxu0 0
        %486 = vmatpush1.bf16.xpose.msra.mxu0 0
        %487 = vmatprep.subr.bf16.mxu0 0
        %488 = vmatpush1.bf16.xpose.msra.mxu0 0
        %489 = vmatprep.subr.bf16.mxu0 0
        %490 = vmatpush1.bf16.xpose.msra.mxu0 0
        %491 = vmatprep.subr.bf16.mxu0 0
        %492 = vmatpush1.bf16.xpose.msra.mxu0 0
        %493 = vmatprep.subr.bf16.mxu0 0
        %494 = vmatpush1.bf16.xpose.msra.mxu0 0
        %495 = vmatprep.subr.bf16.mxu0 0
        %496 = vmatpush1.bf16.xpose.msra.mxu0 0
        %497 = vmatprep.subr.bf16.mxu0 0
        %498 = vmatpush1.bf16.xpose.msra.mxu0 0
        %499 = vmatprep.subr.bf16.mxu0 0
        %500 = vmatpush1.bf16.xpose.msra.mxu0 0
        %501 = vmatprep.subr.bf16.mxu0 0
        %502 = vmatpush1.bf16.xpose.msra.mxu0 0
        %503 = vmatprep.mubr.bf16.mxu0 0
        %504 = vmatmul.mubr.bf16.gmra.mrb[0].mxu0 %v466
        %v505 = vpop.f32.mrb[0].mxu0
        %v506 = vadd.f32 %v459, %v505
        %v507 = vpop.f32.mrb[0].mxu0
        %v508 = vpop.f32.mrb[0].mxu0
        %v509 = vadd.f32 %v460, %v508
        %v510 = vpop.f32.mrb[0].mxu0
        %511 = vdwg.mxu0
        %513 = vrot.lane.b32.xlu0 %v441, 96
        %v514 = vpop.permute.xlu0 %513
        %v516 = vsel %vm464, %v441, 0
        %v519 = vsel %vm464, %v514, 0
        %521 = vmatprep.subr.bf16.mxu0 0
        %522 = vmatpush1.bf16.xpose.msra.mxu0 %v519
        %523 = vmatprep.subr.bf16.mxu0 0
        %524 = vmatpush1.bf16.xpose.msra.mxu0 0
        %525 = vmatprep.subr.bf16.mxu0 0
        %526 = vmatpush1.bf16.xpose.msra.mxu0 0
        %527 = vmatprep.subr.bf16.mxu0 0
        %528 = vmatpush1.bf16.xpose.msra.mxu0 0
        %529 = vmatprep.subr.bf16.mxu0 0
        %530 = vmatpush1.bf16.xpose.msra.mxu0 0
        %531 = vmatprep.subr.bf16.mxu0 0
        %532 = vmatpush1.bf16.xpose.msra.mxu0 0
        %533 = vmatprep.subr.bf16.mxu0 0
        %534 = vmatpush1.bf16.xpose.msra.mxu0 0
        %535 = vmatprep.subr.bf16.mxu0 0
        %536 = vmatpush1.bf16.xpose.msra.mxu0 0
        %537 = vmatprep.subr.bf16.mxu0 0
        %538 = vmatpush1.bf16.xpose.msra.mxu0 0
        %539 = vmatprep.subr.bf16.mxu0 0
        %540 = vmatpush1.bf16.xpose.msra.mxu0 0
        %541 = vmatprep.subr.bf16.mxu0 0
        %542 = vmatpush1.bf16.xpose.msra.mxu0 0
        %543 = vmatprep.subr.bf16.mxu0 0
        %544 = vmatpush1.bf16.xpose.msra.mxu0 0
        %545 = vmatprep.subr.bf16.mxu0 0
        %546 = vmatpush1.bf16.xpose.msra.mxu0 0
        %547 = vmatprep.subr.bf16.mxu0 0
        %548 = vmatpush1.bf16.xpose.msra.mxu0 0
        %549 = vmatprep.subr.bf16.mxu0 0
        %550 = vmatpush1.bf16.xpose.msra.mxu0 0
        %551 = vmatprep.subr.bf16.mxu0 0
        %552 = vmatpush1.bf16.xpose.msra.mxu0 0
        %553 = vmatprep.mubr.bf16.mxu0 0
        %554 = vmatmul.mubr.bf16.gmra.mrb[0].mxu0 %v516
        %v555 = vpop.f32.mrb[0].mxu0
        %v556 = vadd.f32 %v459, %v555
        %v557 = vpop.f32.mrb[0].mxu0
        %v558 = vpop.f32.mrb[0].mxu0
        %v559 = vadd.f32 %v460, %v558
        %v560 = vpop.f32.mrb[0].mxu0
        %561 = vdwg.mxu0
        %563 = vrot.lane.b32.xlu0 %v442, 96
        %v564 = vpop.permute.xlu0 %563
        %v566 = vsel %vm464, %v442, 0
        %v569 = vsel %vm464, %v564, 0
        %571 = vmatprep.subr.bf16.mxu0 0
        %572 = vmatpush1.bf16.xpose.msra.mxu0 %v569
        %573 = vmatprep.subr.bf16.mxu0 0
        %574 = vmatpush1.bf16.xpose.msra.mxu0 0
        %575 = vmatprep.subr.bf16.mxu0 0
        %576 = vmatpush1.bf16.xpose.msra.mxu0 0
        %577 = vmatprep.subr.bf16.mxu0 0
        %578 = vmatpush1.bf16.xpose.msra.mxu0 0
        %579 = vmatprep.subr.bf16.mxu0 0
        %580 = vmatpush1.bf16.xpose.msra.mxu0 0
        %581 = vmatprep.subr.bf16.mxu0 0
        %582 = vmatpush1.bf16.xpose.msra.mxu0 0
        %583 = vmatprep.subr.bf16.mxu0 0
        %584 = vmatpush1.bf16.xpose.msra.mxu0 0
        %585 = vmatprep.subr.bf16.mxu0 0
        %586 = vmatpush1.bf16.xpose.msra.mxu0 0
        %587 = vmatprep.subr.bf16.mxu0 0
        %588 = vmatpush1.bf16.xpose.msra.mxu0 0
        %589 = vmatprep.subr.bf16.mxu0 0
        %590 = vmatpush1.bf16.xpose.msra.mxu0 0
        %591 = vmatprep.subr.bf16.mxu0 0
        %592 = vmatpush1.bf16.xpose.msra.mxu0 0
        %593 = vmatprep.subr.bf16.mxu0 0
        %594 = vmatpush1.bf16.xpose.msra.mxu0 0
        %595 = vmatprep.subr.bf16.mxu0 0
        %596 = vmatpush1.bf16.xpose.msra.mxu0 0
        %597 = vmatprep.subr.bf16.mxu0 0
        %598 = vmatpush1.bf16.xpose.msra.mxu0 0
        %599 = vmatprep.subr.bf16.mxu0 0
        %600 = vmatpush1.bf16.xpose.msra.mxu0 0
        %601 = vmatprep.subr.bf16.mxu0 0
        %602 = vmatpush1.bf16.xpose.msra.mxu0 0
        %603 = vmatprep.mubr.bf16.mxu0 0
        %604 = vmatmul.mubr.bf16.gmra.mrb[0].mxu0 %v566
        %v605 = vpop.f32.mrb[0].mxu0
        %v606 = vadd.f32 %v459, %v605
        %v607 = vpop.f32.mrb[0].mxu0
        %v608 = vpop.f32.mrb[0].mxu0
        %v609 = vadd.f32 %v460, %v608
        %v610 = vpop.f32.mrb[0].mxu0
        %611 = vdwg.mxu0
        %613 = vrot.lane.b32.xlu0 %v443, 96
        %v614 = vpop.permute.xlu0 %613
        %v616 = vsel %vm464, %v443, 0
        %v619 = vsel %vm464, %v614, 0
        %621 = vmatprep.subr.bf16.mxu0 0
        %622 = vmatpush1.bf16.xpose.msra.mxu0 %v619
        %623 = vmatprep.subr.bf16.mxu0 0
        %624 = vmatpush1.bf16.xpose.msra.mxu0 0
        %625 = vmatprep.subr.bf16.mxu0 0
        %626 = vmatpush1.bf16.xpose.msra.mxu0 0
        %627 = vmatprep.subr.bf16.mxu0 0
        %628 = vmatpush1.bf16.xpose.msra.mxu0 0
        %629 = vmatprep.subr.bf16.mxu0 0
        %630 = vmatpush1.bf16.xpose.msra.mxu0 0
        %631 = vmatprep.subr.bf16.mxu0 0
        %632 = vmatpush1.bf16.xpose.msra.mxu0 0
        %633 = vmatprep.subr.bf16.mxu0 0
        %634 = vmatpush1.bf16.xpose.msra.mxu0 0
        %635 = vmatprep.subr.bf16.mxu0 0
        %636 = vmatpush1.bf16.xpose.msra.mxu0 0
        %637 = vmatprep.subr.bf16.mxu0 0
        %638 = vmatpush1.bf16.xpose.msra.mxu0 0
        %639 = vmatprep.subr.bf16.mxu0 0
        %640 = vmatpush1.bf16.xpose.msra.mxu0 0
        %641 = vmatprep.subr.bf16.mxu0 0
        %642 = vmatpush1.bf16.xpose.msra.mxu0 0
        %643 = vmatprep.subr.bf16.mxu0 0
        %644 = vmatpush1.bf16.xpose.msra.mxu0 0
        %645 = vmatprep.subr.bf16.mxu0 0
        %646 = vmatpush1.bf16.xpose.msra.mxu0 0
        %647 = vmatprep.subr.bf16.mxu0 0
        %648 = vmatpush1.bf16.xpose.msra.mxu0 0
        %649 = vmatprep.subr.bf16.mxu0 0
        %650 = vmatpush1.bf16.xpose.msra.mxu0 0
        %651 = vmatprep.subr.bf16.mxu0 0
        %652 = vmatpush1.bf16.xpose.msra.mxu0 0
        %653 = vmatprep.mubr.bf16.mxu0 0
        %654 = vmatmul.mubr.bf16.gmra.mrb[0].mxu0 %v616
        %v655 = vpop.f32.mrb[0].mxu0
        %v656 = vadd.f32 %v459, %v655
        %v657 = vpop.f32.mrb[0].mxu0
        %v658 = vpop.f32.mrb[0].mxu0
        %v659 = vadd.f32 %v460, %v658
        %v660 = vpop.f32.mrb[0].mxu0
        %661 = vdwg.mxu0
        %vm662 = vcmask 130048
        %v663 = vsel %vm662, %v506, -inf
        %664 = vmax.xlane.f32.xlu0 %v663
        %v665 = vpop.xlane.xlu0 %664
        %v666 = vsel %vm662, %v509, -inf
        %667 = vmax.xlane.f32.xlu0 %v666
        %v668 = vpop.xlane.xlu0 %667
        %v669 = vsel %vm662, %v556, -inf
        %670 = vmax.xlane.f32.xlu0 %v669
        %v671 = vpop.xlane.xlu0 %670
        %v672 = vsel %vm662, %v559, -inf
        %673 = vmax.xlane.f32.xlu0 %v672
        %v674 = vpop.xlane.xlu0 %673
        %v675 = vsel %vm662, %v606, -inf
        %676 = vmax.xlane.f32.xlu0 %v675
        %v677 = vpop.xlane.xlu0 %676
        %v678 = vsel %vm662, %v609, -inf
        %679 = vmax.xlane.f32.xlu0 %v678
        %v680 = vpop.xlane.xlu0 %679
        %v681 = vsel %vm662, %v656, -inf
        %682 = vmax.xlane.f32.xlu0 %v681
        %v683 = vpop.xlane.xlu0 %682
        %v684 = vsel %vm662, %v659, -inf
        %685 = vmax.xlane.f32.xlu0 %v684
        %v686 = vpop.xlane.xlu0 %685
        %v687 = vsub.f32 %v506, %v665
        %v688 = vsub.f32 %v509, %v668
        %v689 = vsub.f32 %v556, %v671
        %v690 = vsub.f32 %v559, %v674
        %v691 = vsub.f32 %v606, %v677
        %v692 = vsub.f32 %v609, %v680
        %v693 = vsub.f32 %v656, %v683
        %v694 = vsub.f32 %v659, %v686
        %v695 = vmul.f32 %v687, 1.442695
        %v696 = vpow.pop %v695
        %v697 = vmul.f32 %v688, 1.442695
        %v698 = vpow.pop %v697
        %v699 = vmul.f32 %v689, 1.442695
        %v700 = vpow.pop %v699
        %v701 = vmul.f32 %v690, 1.442695
        %v702 = vpow.pop %v701
        %v703 = vmul.f32 %v691, 1.442695
        %v704 = vpow.pop %v703
        %v705 = vmul.f32 %v692, 1.442695
        %v706 = vpow.pop %v705
        %v707 = vmul.f32 %v693, 1.442695
        %v708 = vpow.pop %v707
        %v709 = vmul.f32 %v694, 1.442695
        %v710 = vpow.pop %v709
        %v711 = vsel %vm662, %v696, 0.0
        %712 = vadd.xlane.f32.xlu0 %v711
        %v713 = vpop.xlane.xlu0 %712
        %v714 = vsel %vm662, %v698, 0.0
        %715 = vadd.xlane.f32.xlu0 %v714
        %v716 = vpop.xlane.xlu0 %715
        %v717 = vsel %vm662, %v700, 0.0
        %718 = vadd.xlane.f32.xlu0 %v717
        %v719 = vpop.xlane.xlu0 %718
        %v720 = vsel %vm662, %v702, 0.0
        %721 = vadd.xlane.f32.xlu0 %v720
        %v722 = vpop.xlane.xlu0 %721
        %v723 = vsel %vm662, %v704, 0.0
        %724 = vadd.xlane.f32.xlu0 %v723
        %v725 = vpop.xlane.xlu0 %724
        %v726 = vsel %vm662, %v706, 0.0
        %727 = vadd.xlane.f32.xlu0 %v726
        %v728 = vpop.xlane.xlu0 %727
        %v729 = vsel %vm662, %v708, 0.0
        %730 = vadd.xlane.f32.xlu0 %v729
        %v731 = vpop.xlane.xlu0 %730
        %v732 = vsel %vm662, %v710, 0.0
        %733 = vadd.xlane.f32.xlu0 %v732
        %v734 = vpop.xlane.xlu0 %733
        %v735 = vrcp.pop %v713
        %v736 = vrcp.pop %v716
        %v737 = vrcp.pop %v719
        %v738 = vrcp.pop %v722
        %v739 = vrcp.pop %v725
        %v740 = vrcp.pop %v728
        %v741 = vrcp.pop %v731
        %v742 = vrcp.pop %v734
        %v743 = vmul.f32 %v696, %v735
        %v744 = vmul.f32 %v698, %v736
        %v745 = vmul.f32 %v700, %v737
        %v746 = vmul.f32 %v702, %v738
        %v747 = vmul.f32 %v704, %v739
        %v748 = vmul.f32 %v706, %v740
        %v749 = vmul.f32 %v708, %v741
        %v750 = vmul.f32 %v710, %v742
        %v751 = vpack.c.bf16 %v744, %v743
        %v752 = vpack.c.bf16 %v746, %v745
        %v753 = vpack.c.bf16 %v748, %v747
        %v754 = vpack.c.bf16 %v750, %v749
        %755 = vrot.lane.b32.xlu0 %v440, 64
        %v756 = vpop.permute.xlu0 %755
        %v759 = vsel %vm662, %v751, 0
        %761 = vmatprep.subr.bf16.mxu0 0
        %762 = vmatpush1.bf16.msra.mxu0 %v756
        %763 = vmatprep.subr.bf16.mxu0 0
        %764 = vmatpush1.bf16.msra.mxu0 0
        %765 = vmatprep.subr.bf16.mxu0 0
        %766 = vmatpush1.bf16.msra.mxu0 0
        %767 = vmatprep.subr.bf16.mxu0 0
        %768 = vmatpush1.bf16.msra.mxu0 0
        %769 = vmatprep.subr.bf16.mxu0 0
        %770 = vmatpush1.bf16.msra.mxu0 0
        %771 = vmatprep.subr.bf16.mxu0 0
        %772 = vmatpush1.bf16.msra.mxu0 0
        %773 = vmatprep.subr.bf16.mxu0 0
        %774 = vmatpush1.bf16.msra.mxu0 0
        %775 = vmatprep.subr.bf16.mxu0 0
        %776 = vmatpush1.bf16.msra.mxu0 0
        %777 = vmatprep.subr.bf16.mxu0 0
        %778 = vmatpush1.bf16.msra.mxu0 0
        %779 = vmatprep.subr.bf16.mxu0 0
        %780 = vmatpush1.bf16.msra.mxu0 0
        %781 = vmatprep.subr.bf16.mxu0 0
        %782 = vmatpush1.bf16.msra.mxu0 0
        %783 = vmatprep.subr.bf16.mxu0 0
        %784 = vmatpush1.bf16.msra.mxu0 0
        %785 = vmatprep.subr.bf16.mxu0 0
        %786 = vmatpush1.bf16.msra.mxu0 0
        %787 = vmatprep.subr.bf16.mxu0 0
        %788 = vmatpush1.bf16.msra.mxu0 0
        %789 = vmatprep.subr.bf16.mxu0 0
        %790 = vmatpush1.bf16.msra.mxu0 0
        %791 = vmatprep.subr.bf16.mxu0 0
        %792 = vmatpush1.bf16.msra.mxu0 0
        %793 = vmatprep.mubr.bf16.mxu0 0
        %794 = vmatmul.mubr.bf16.gmra.mrb[0].mxu0 %v759
        %v795 = vpop.f32.mrb[0].mxu0
        %v796 = vadd.f32 0.0, %v795
        %v797 = vpop.f32.mrb[0].mxu0
        %v798 = vpop.f32.mrb[0].mxu0
        %v799 = vadd.f32 0.0, %v798
        %v800 = vpop.f32.mrb[0].mxu0
        %801 = vdwg.mxu0
        %802 = vrot.lane.b32.xlu0 %v441, 64
        %v803 = vpop.permute.xlu0 %802
        %v806 = vsel %vm662, %v752, 0
        %808 = vmatprep.subr.bf16.mxu0 0
        %809 = vmatpush1.bf16.msra.mxu0 %v803
        %810 = vmatprep.subr.bf16.mxu0 0
        %811 = vmatpush1.bf16.msra.mxu0 0
        %812 = vmatprep.subr.bf16.mxu0 0
        %813 = vmatpush1.bf16.msra.mxu0 0
        %814 = vmatprep.subr.bf16.mxu0 0
        %815 = vmatpush1.bf16.msra.mxu0 0
        %816 = vmatprep.subr.bf16.mxu0 0
        %817 = vmatpush1.bf16.msra.mxu0 0
        %818 = vmatprep.subr.bf16.mxu0 0
        %819 = vmatpush1.bf16.msra.mxu0 0
        %820 = vmatprep.subr.bf16.mxu0 0
        %821 = vmatpush1.bf16.msra.mxu0 0
        %822 = vmatprep.subr.bf16.mxu0 0
        %823 = vmatpush1.bf16.msra.mxu0 0
        %824 = vmatprep.subr.bf16.mxu0 0
        %825 = vmatpush1.bf16.msra.mxu0 0
        %826 = vmatprep.subr.bf16.mxu0 0
        %827 = vmatpush1.bf16.msra.mxu0 0
        %828 = vmatprep.subr.bf16.mxu0 0
        %829 = vmatpush1.bf16.msra.mxu0 0
        %830 = vmatprep.subr.bf16.mxu0 0
        %831 = vmatpush1.bf16.msra.mxu0 0
        %832 = vmatprep.subr.bf16.mxu0 0
        %833 = vmatpush1.bf16.msra.mxu0 0
        %834 = vmatprep.subr.bf16.mxu0 0
        %835 = vmatpush1.bf16.msra.mxu0 0
        %836 = vmatprep.subr.bf16.mxu0 0
        %837 = vmatpush1.bf16.msra.mxu0 0
        %838 = vmatprep.subr.bf16.mxu0 0
        %839 = vmatpush1.bf16.msra.mxu0 0
        %840 = vmatprep.mubr.bf16.mxu0 0
        %841 = vmatmul.mubr.bf16.gmra.mrb[0].mxu0 %v806
        %v842 = vpop.f32.mrb[0].mxu0
        %v843 = vadd.f32 0.0, %v842
        %v844 = vpop.f32.mrb[0].mxu0
        %v845 = vpop.f32.mrb[0].mxu0
        %v846 = vadd.f32 0.0, %v845
        %v847 = vpop.f32.mrb[0].mxu0
        %848 = vdwg.mxu0
        %849 = vrot.lane.b32.xlu0 %v442, 64
        %v850 = vpop.permute.xlu0 %849
        %v853 = vsel %vm662, %v753, 0
        %855 = vmatprep.subr.bf16.mxu0 0
        %856 = vmatpush1.bf16.msra.mxu0 %v850
        %857 = vmatprep.subr.bf16.mxu0 0
        %858 = vmatpush1.bf16.msra.mxu0 0
        %859 = vmatprep.subr.bf16.mxu0 0
        %860 = vmatpush1.bf16.msra.mxu0 0
        %861 = vmatprep.subr.bf16.mxu0 0
        %862 = vmatpush1.bf16.msra.mxu0 0
        %863 = vmatprep.subr.bf16.mxu0 0
        %864 = vmatpush1.bf16.msra.mxu0 0
        %865 = vmatprep.subr.bf16.mxu0 0
        %866 = vmatpush1.bf16.msra.mxu0 0
        %867 = vmatprep.subr.bf16.mxu0 0
        %868 = vmatpush1.bf16.msra.mxu0 0
        %869 = vmatprep.subr.bf16.mxu0 0
        %870 = vmatpush1.bf16.msra.mxu0 0
        %871 = vmatprep.subr.bf16.mxu0 0
        %872 = vmatpush1.bf16.msra.mxu0 0
        %873 = vmatprep.subr.bf16.mxu0 0
        %874 = vmatpush1.bf16.msra.mxu0 0
        %875 = vmatprep.subr.bf16.mxu0 0
        %876 = vmatpush1.bf16.msra.mxu0 0
        %877 = vmatprep.subr.bf16.mxu0 0
        %878 = vmatpush1.bf16.msra.mxu0 0
        %879 = vmatprep.subr.bf16.mxu0 0
        %880 = vmatpush1.bf16.msra.mxu0 0
        %881 = vmatprep.subr.bf16.mxu0 0
        %882 = vmatpush1.bf16.msra.mxu0 0
        %883 = vmatprep.subr.bf16.mxu0 0
        %884 = vmatpush1.bf16.msra.mxu0 0
        %885 = vmatprep.subr.bf16.mxu0 0
        %886 = vmatpush1.bf16.msra.mxu0 0
        %887 = vmatprep.mubr.bf16.mxu0 0
        %888 = vmatmul.mubr.bf16.gmra.mrb[0].mxu0 %v853
        %v889 = vpop.f32.mrb[0].mxu0
        %v890 = vadd.f32 0.0, %v889
        %v891 = vpop.f32.mrb[0].mxu0
        %v892 = vpop.f32.mrb[0].mxu0
        %v893 = vadd.f32 0.0, %v892
        %v894 = vpop.f32.mrb[0].mxu0
        %895 = vdwg.mxu0
        %896 = vrot.lane.b32.xlu0 %v443, 64
        %v897 = vpop.permute.xlu0 %896
        %v900 = vsel %vm662, %v754, 0
        %902 = vmatprep.subr.bf16.mxu0 0
        %903 = vmatpush1.bf16.msra.mxu0 %v897
        %904 = vmatprep.subr.bf16.mxu0 0
        %905 = vmatpush1.bf16.msra.mxu0 0
        %906 = vmatprep.subr.bf16.mxu0 0
        %907 = vmatpush1.bf16.msra.mxu0 0
        %908 = vmatprep.subr.bf16.mxu0 0
        %909 = vmatpush1.bf16.msra.mxu0 0
        %910 = vmatprep.subr.bf16.mxu0 0
        %911 = vmatpush1.bf16.msra.mxu0 0
        %912 = vmatprep.subr.bf16.mxu0 0
        %913 = vmatpush1.bf16.msra.mxu0 0
        %914 = vmatprep.subr.bf16.mxu0 0
        %915 = vmatpush1.bf16.msra.mxu0 0
        %916 = vmatprep.subr.bf16.mxu0 0
        %917 = vmatpush1.bf16.msra.mxu0 0
        %918 = vmatprep.subr.bf16.mxu0 0
        %919 = vmatpush1.bf16.msra.mxu0 0
        %920 = vmatprep.subr.bf16.mxu0 0
        %921 = vmatpush1.bf16.msra.mxu0 0
        %922 = vmatprep.subr.bf16.mxu0 0
        %923 = vmatpush1.bf16.msra.mxu0 0
        %924 = vmatprep.subr.bf16.mxu0 0
        %925 = vmatpush1.bf16.msra.mxu0 0
        %926 = vmatprep.subr.bf16.mxu0 0
        %927 = vmatpush1.bf16.msra.mxu0 0
        %928 = vmatprep.subr.bf16.mxu0 0
        %929 = vmatpush1.bf16.msra.mxu0 0
        %930 = vmatprep.subr.bf16.mxu0 0
        %931 = vmatpush1.bf16.msra.mxu0 0
        %932 = vmatprep.subr.bf16.mxu0 0
        %933 = vmatpush1.bf16.msra.mxu0 0
        %934 = vmatprep.mubr.bf16.mxu0 0
        %935 = vmatmul.mubr.bf16.gmra.mrb[0].mxu0 %v900
        %v936 = vpop.f32.mrb[0].mxu0
        %v937 = vadd.f32 0.0, %v936
        %v938 = vpop.f32.mrb[0].mxu0
        %v939 = vpop.f32.mrb[0].mxu0
        %v940 = vadd.f32 0.0, %v939
        %v941 = vpop.f32.mrb[0].mxu0
        %942 = vdwg.mxu0
        %945 = vrot.lane.b32.xlu0 %v843, 8
        %v946 = vpop.permute.xlu0 %945
        %947 = vrot.lane.b32.xlu0 %v846, 8
        %v948 = vpop.permute.xlu0 %947
        %953 = vrot.lane.b32.xlu0 %v890, 16
        %v954 = vpop.permute.xlu0 %953
        %955 = vrot.lane.b32.xlu0 %v893, 16
        %v956 = vpop.permute.xlu0 %955
        %961 = vrot.lane.b32.xlu0 %v937, 24
        %v962 = vpop.permute.xlu0 %961
        %963 = vrot.lane.b32.xlu0 %v940, 24
        %v964 = vpop.permute.xlu0 %963
        %v967 = vsel %vm464, %v796, %v946
        %v968 = vsel %vm464, %v799, %v948
        %v969 = vsel %vm662, %v967, %v954
        %v970 = vsel %vm662, %v968, %v956
        %vm971 = vcmask 195584
        %v972 = vsel %vm971, %v969, %v962
        %v973 = vsel %vm971, %v970, %v964
        %v974 = vpack.c.bf16 %v973, %v972
        %v975 = vld [vmem:[#allocation7] sm:$0xf]
        %v976 = vld [vmem:[#allocation7 + $0x4] sm:$0xf]
        %v977 = vld [vmem:[#allocation7 + $0x8] sm:$0xf]
        %v978 = vld [vmem:[#allocation7 + $0xc] sm:$0xf]
        %v979 = vld [vmem:[%s4] sm:$0x1]
        %v981 = vlaneseq
        %v982 = vshrl.u32 %v981, 7
        %v983 = vsub.s32 0, %v982
        %v984 = vrot.slane %v979, %v983
        %v990 = vunpack.c.l.b16 %v975
        %v991 = vunpack.c.l.b16 %v976
        %v992 = vunpack.c.l.b16 %v977
        %v993 = vunpack.c.l.b16 %v978
        %v994 = vpack.c.b16 %v991, %v990
        %v995 = vpack.c.b16 %v993, %v992
        %v999 = vsel %vm375, %v974, 0
        %1001 = vmatprep.subr.bf16.mxu0 0
        %1002 = vmatpush1.bf16.msra.mxu0 %v994
        %1003 = vmatprep.subr.bf16.mxu0 0
        %1004 = vmatpush1.bf16.msra.mxu0 %v995
        %1005 = vmatprep.subr.bf16.mxu0 0
        %1006 = vmatpush1.bf16.msra.mxu0 0
        %1007 = vmatprep.subr.bf16.mxu0 0
        %1008 = vmatpush1.bf16.msra.mxu0 0
        %1009 = vmatprep.subr.bf16.mxu0 0
        %1010 = vmatpush1.bf16.msra.mxu0 0
        %1011 = vmatprep.subr.bf16.mxu0 0
        %1012 = vmatpush1.bf16.msra.mxu0 0
        %1013 = vmatprep.subr.bf16.mxu0 0
        %1014 = vmatpush1.bf16.msra.mxu0 0
        %1015 = vmatprep.subr.bf16.mxu0 0
        %1016 = vmatpush1.bf16.msra.mxu0 0
        %1017 = vmatprep.subr.bf16.mxu0 0
        %1018 = vmatpush1.bf16.msra.mxu0 0
        %1019 = vmatprep.subr.bf16.mxu0 0
        %1020 = vmatpush1.bf16.msra.mxu0 0
        %1021 = vmatprep.subr.bf16.mxu0 0
        %1022 = vmatpush1.bf16.msra.mxu0 0
        %1023 = vmatprep.subr.bf16.mxu0 0
        %1024 = vmatpush1.bf16.msra.mxu0 0
        %1025 = vmatprep.subr.bf16.mxu0 0
        %1026 = vmatpush1.bf16.msra.mxu0 0
        %1027 = vmatprep.subr.bf16.mxu0 0
        %1028 = vmatpush1.bf16.msra.mxu0 0
        %1029 = vmatprep.subr.bf16.mxu0 0
        %1030 = vmatpush1.bf16.msra.mxu0 0
        %1031 = vmatprep.subr.bf16.mxu0 0
        %1032 = vmatpush1.bf16.msra.mxu0 0
        %1033 = vmatprep.mubr.bf16.mxu0 0
        %1034 = vmatmul.mubr.bf16.gmra.mrb[0].mxu0 %v999
        %v1035 = vpop.f32.mrb[0].mxu0
        %v1036 = vadd.f32 %v984, %v1035
        %v1037 = vpop.f32.mrb[0].mxu0
        %v1038 = vpop.f32.mrb[0].mxu0
        %v1039 = vadd.f32 %v984, %v1038
        %v1040 = vpop.f32.mrb[0].mxu0
        %1041 = vdwg.mxu0
        %v1042 = vadd.f32 %v345, %v1036
        %v1043 = vadd.f32 %v346, %v1039
        %v1044 = vpack.c.bf16 %v1043, %v1042
        %v1046 = vunpack.c.l.b16 %v1044
        %v1047 = vunpack.c.h.b16 %v1044
        %v1048 = vpack.c.b16 %v1046, %v1046
        %v1049 = vpack.c.b16 %v1047, %v1047
        %vm1052 = vcmask 257024
        %1053 = vst.msk [vmem:[%s329] sm:$0xf] %vm1052, %v1048
        %1054 = vst.msk [vmem:[%s329 + $0x4] sm:$0xf] %vm1052, %v1049
        %v1055 = vsel %vm375, %v1042, 0.0
        %v1056 = vsel %vm375, %v1043, 0.0
        %v1057 = vadd.f32 %v1055, %v1056
        %v1058 = vrot.slane %v1057, 4
        %v1059 = vadd.f32 %v1057, %v1058
        %v1060 = vrot.slane %v1059, 2
        %v1061 = vadd.f32 %v1059, %v1060
        %v1062 = vrot.slane %v1061, 1
        %v1063 = vadd.f32 %v1061, %v1062
        %vm1064 = vcmask 253952
        %1065 = vst.msk [vmem:[%s335] sm:$0x1] %vm1064, %v1063
        %v1066 = vmul.f32 %v1042, %v1042
        %v1067 = vmul.f32 %v1043, %v1043
        %v1068 = vsel %vm375, %v1066, 0.0
        %v1069 = vsel %vm375, %v1067, 0.0
        %v1070 = vadd.f32 %v1068, %v1069
        %v1071 = vrot.slane %v1070, 4
        %v1072 = vadd.f32 %v1070, %v1071
        %v1073 = vrot.slane %v1072, 2
        %v1074 = vadd.f32 %v1072, %v1073
        %v1075 = vrot.slane %v1074, 1
        %v1076 = vadd.f32 %v1074, %v1075
        %1077 = vst.msk [vmem:[%s341] sm:$0x1] %vm1064, %v1076
        %s1078 = sand.u32 %s147, 1
        %s1079 = scalar_lea.sflag [#allocation4], %s1078
        %s1080 = sand.u32 %s147, 1
        %s1081 = smul.addr %s1080, 8
        %s1082 = scalar_lea.vmem [#allocation8], %s1081
        %s1083 = sand.u32 %s29, 1
        %s1084 = scalar_lea.sflag [#allocation10], %s1083
        %s1085 = sand.u32 %s173, 1
        %s1086 = scalar_lea.vmem [#allocation9], %s1085
        %s1087 = sand.u32 %s29, 1
        %s1088 = scalar_lea.sflag [#allocation10], %s1087
        %s1089 = sand.u32 %s199, 1
        %s1090 = scalar_lea.vmem [#allocation11], %s1089
        // Predicated region
        $region53: #{tpu_custom_call.1} parent=39 // pred_check
          %p1091 = pneg %p157
        $region54: #{tpu_custom_call.1} parent=39 // pred_check_branch
          %1093 = sbr.rel (%p1091) target = $region56
        $region55: #{tpu_custom_call.1} parent=39 // pred_region
          %s1095 = ssub.s32 128, 128
          %1096 = vsyncadd %s1079, %s1095
          %s1097 = smul.addr %s29, 2
          %s1098 = smul.addr %s1097, 64
          %s1099 = scalar_lea.hbm %s5, %s1098
          %s1100 = sshll.u32 %s1082, 4
          %s1101 = int_to_ptr.vmem [resolvable:$true] %s1100
          %1106 = dma.vmem_to_hbm [thread:$0]  %s1101, 128, %s1099, %s1079, 64, 64, 4
        $region56: #{tpu_custom_call.1} parent=39 // pred_fallthru
          _
        // Predicated region
        $region57: #{tpu_custom_call.1} parent=39 // pred_check
          %p1107 = pneg %p183
        $region58: #{tpu_custom_call.1} parent=39 // pred_check_branch
          %1109 = sbr.rel (%p1107) target = $region60
        $region59: #{tpu_custom_call.1} parent=39 // pred_region
          %s1111 = ssub.s32 16, 16
          %1112 = vsyncadd %s1084, %s1111
          %s1113 = smul.addr %s29, 16
          %s1114 = scalar_lea.hbm %s6, %s1113
          %s1116 = sshll.u32 %s1086, 4
          %s1117 = int_to_ptr.vmem [resolvable:$true] %s1116
          %1119 = dma.vmem_to_hbm [thread:$0]  %s1117, 16, %s1114, %s1084
        $region60: #{tpu_custom_call.1} parent=39 // pred_fallthru
          _
        // Predicated region
        $region61: #{tpu_custom_call.1} parent=39 // pred_check
          %p1120 = pneg %p209
        $region62: #{tpu_custom_call.1} parent=39 // pred_check_branch
          %1122 = sbr.rel (%p1120) target = $region64
        $region63: #{tpu_custom_call.1} parent=39 // pred_region
          %s1124 = ssub.s32 16, 16
          %1125 = vsyncadd %s1088, %s1124
          %s1126 = smul.addr %s29, 16
          %s1127 = scalar_lea.hbm %s7, %s1126
          %s1129 = sshll.u32 %s1090, 4
          %s1130 = int_to_ptr.vmem [resolvable:$true] %s1129
          %1132 = dma.vmem_to_hbm [thread:$0]  %s1130, 16, %s1127, %s1088
        $region64: #{tpu_custom_call.1} parent=39 // pred_fallthru
          _
      $region40: #{tpu_custom_call.1} parent=5 // pred_fallthru
        _
      %p1133 = scmp.le.s32.totalorder 2, %s24
      // Predicated region
      $region65: #{tpu_custom_call.1} parent=5 // pred_check
        %p1134 = pneg %p1133
      $region66: #{tpu_custom_call.1} parent=5 // pred_check_branch
        %1136 = sbr.rel (%p1134) target = $region68
      $region67: #{tpu_custom_call.1} parent=5 // pred_region
        %s1137 = ssub.s32 %s24, 2
        // Predicated region
        $region69: #{tpu_custom_call.1} parent=67 // pred_check
          %p1138 = pneg %p163
        $region70: #{tpu_custom_call.1} parent=67 // pred_check_branch
          %1140 = sbr.rel (%p1138) target = $region72
        $region71: #{tpu_custom_call.1} parent=67 // pred_region
          %s1141 = sand.u32 %s148, 1
          %s1142 = scalar_lea.sflag [#allocation4], %s1141
          %s1143 = sand.u32 %s148, 1
          %s1144 = smul.addr %s1143, 8
          %s1145 = scalar_lea.vmem [#allocation8], %s1144
          %1146 = dma.done %s1142, 128
        $region72: #{tpu_custom_call.1} parent=67 // pred_fallthru
          _
        // Predicated region
        $region73: #{tpu_custom_call.1} parent=67 // pred_check
          %p1147 = pneg %p189
        $region74: #{tpu_custom_call.1} parent=67 // pred_check_branch
          %1149 = sbr.rel (%p1147) target = $region76
        $region75: #{tpu_custom_call.1} parent=67 // pred_region
          %s1150 = sand.u32 %s30, 1
          %s1151 = scalar_lea.sflag [#allocation10], %s1150
          %s1152 = sand.u32 %s174, 1
          %s1153 = scalar_lea.vmem [#allocation9], %s1152
          %1154 = dma.done %s1151, 16
        $region76: #{tpu_custom_call.1} parent=67 // pred_fallthru
          _
        // Predicated region
        $region77: #{tpu_custom_call.1} parent=67 // pred_check
          %p1155 = pneg %p215
        $region78: #{tpu_custom_call.1} parent=67 // pred_check_branch
          %1157 = sbr.rel (%p1155) target = $region80
        $region79: #{tpu_custom_call.1} parent=67 // pred_region
          %s1158 = sand.u32 %s30, 1
          %s1159 = scalar_lea.sflag [#allocation10], %s1158
          %s1160 = sand.u32 %s200, 1
          %s1161 = scalar_lea.vmem [#allocation11], %s1160
          %1162 = dma.done %s1159, 16
        $region80: #{tpu_custom_call.1} parent=67 // pred_fallthru
          _
      $region68: #{tpu_custom_call.1} parent=5 // pred_fallthru
        _
    $region6: #{tpu_custom_call.1} parent=1 // loop_footer
      %s28 = sadd.s32 1, %s24
    $region7: #{tpu_custom_call.1} parent=1 // loop_footer_branch
      %23 = sbr.rel target = $region3
    $region8: #{tpu_custom_call.1} parent=1 // loop_exit
      _
    %1163 = vsyncpa [#allocation3], 1
    %s1164 = scalar_lea.sflag [#allocation3], 1
    %1165 = vsyncpa %s1164, 1
    %1166 = vsyncpa [#allocation6], 1
    %1167 = vsyncpa [#allocation4], 1
    %s1168 = scalar_lea.sflag [#allocation4], 1
    %1169 = vsyncpa %s1168, 1
    %1170 = vsyncpa [#allocation10], 1
    %s1171 = scalar_lea.sflag [#allocation10], 1
    %1172 = vsyncpa %s1171, 1

</llo_original>
